<compile_context>
chip_gen: v7x
topology: tpu7x:2x2x1
jax: 0.10.0
libtpu: 0.0.40
codegen_flags: <defaults>
</compile_context>

<pallas_src>
import math
import string

import jax
import jax.numpy as jnp
from jax import lax
from jax.experimental import pallas as pl
from jax.experimental.pallas import tpu as pltpu

ALL_LETTERS = string.ascii_letters + " .,;'"
N_LETTERS = len(ALL_LETTERS)          # 57
N_HIDDEN = 128
N_OUTPUT = 18                         # number of categories (tutorial default)
O_PAD = 128                           # lane-dense padded output width
NEG_BIG = -1e30                       # padded-logit bias -> ~0 probability


def letter_to_index(letter):
    return ALL_LETTERS.find(letter)


# ---------------------------------------------------------------------------
# Pallas kernel: the whole letter sequence in one invocation (no grid).
# ---------------------------------------------------------------------------
def _lstm_rnn_seq_kernel(idx_ref,                      # (T,) int32, SMEM
                         h0_ref,                       # (1, H) VMEM
                         w_xg_ref, w_hg_ref, b_g_ref,  # gate weights, order [i, g, o]
                         w_xo_ref, w_ho_ref, b_o_ref,  # output Linear (padded to O_PAD)
                         logp_ref, h_out_ref, c_out_ref):
    H = N_HIDDEN
    T = idx_ref.shape[0]                               # static sequence length

    # Hoist the resident weight loads out of the recurrence loop.
    w_hg = w_hg_ref[...]                               # (H, 3H)
    b_g = b_g_ref[...]                                 # (1, 3H)

    def lstm_cell(idx, h_prev):
        # x is one-hot  =>  x @ W_x is a single row gather of W_x.
        gx = w_xg_ref[pl.ds(idx, 1), :]                # (1, 3H)
        gates = gx + jnp.dot(h_prev, w_hg,
                             preferred_element_type=jnp.float32) + b_g
        i_g = jax.nn.sigmoid(gates[:, 0:H])
        g_g = jnp.tanh(gates[:, H:2 * H])
        o_g = jax.nn.sigmoid(gates[:, 2 * H:3 * H])
        c_new = i_g * g_g                              # c' = f*0 + i*g
        h_new = o_g * jnp.tanh(c_new)
        return h_new, c_new

    # Steps 0 .. T-2 only need the recurrent h (their outputs are discarded by
    # the torch loop).  The h carry lives in vregs; no VMEM scratch traffic.
    h_prev = h0_ref[...]                               # (1, H)
    if T > 1:
        def step(t, h):
            h_new, _ = lstm_cell(idx_ref[t], h)
            return h_new
        # Short names: full unroll gives the LLO scheduler the whole recurrence.
        h_prev = lax.fori_loop(0, T - 1, step, h_prev, unroll=(T <= 32))

    # ---- final step: LSTM cell + i2o Linear + LogSoftmax on [x_T, h_{T-1}] --
    idx_last = idx_ref[T - 1]
    h_new, c_new = lstm_cell(idx_last, h_prev)

    ox = w_xo_ref[pl.ds(idx_last, 1), :]               # (1, O_PAD)
    logits = ox + jnp.dot(h_prev, w_ho_ref[...],
                          preferred_element_type=jnp.float32) + b_o_ref[...]
    m = jnp.max(logits, axis=-1, keepdims=True)
    s = jnp.sum(jnp.exp(logits - m), axis=-1, keepdims=True)
    logp_ref[...] = logits - m - jnp.log(s)
    h_out_ref[...] = h_new
    c_out_ref[...] = c_new


# ---------------------------------------------------------------------------
# pallas_call wrapper (one call per name; recompiles per sequence length T).
# ---------------------------------------------------------------------------
@jax.jit
def _run_fused(letter_idx, h0, kern):
    H = N_HIDDEN
    vmem = pl.BlockSpec(memory_space=pltpu.MemorySpace.VMEM)
    smem = pl.BlockSpec(memory_space=pltpu.MemorySpace.SMEM)
    return pl.pallas_call(
        _lstm_rnn_seq_kernel,
        out_shape=(
            jax.ShapeDtypeStruct((1, O_PAD), jnp.float32),
            jax.ShapeDtypeStruct((1, H), jnp.float32),
            jax.ShapeDtypeStruct((1, H), jnp.float32),
        ),
        in_specs=[
            smem,                       # letter indices -> SMEM scalars
            vmem,                       # h0
            vmem, vmem, vmem,           # w_xg (64,3H), w_hg (H,3H), b_g (1,3H)
            vmem, vmem, vmem,           # w_xo (64,O_PAD), w_ho (H,O_PAD), b_o (1,O_PAD)
        ],
        out_specs=(vmem, vmem, vmem),
        compiler_params=pltpu.CompilerParams(
            vmem_limit_bytes=16 * 1024 * 1024,   # resident footprint < 0.5 MiB
        ),
    )(letter_idx, h0, kern["w_xg"], kern["w_hg"], kern["b_g"],
      kern["w_xo"], kern["w_ho"], kern["b_o"])


def lstm_rnn_sequence(kern, letter_indices, h0):
    """Run the whole letter sequence in one fused pallas_call.

    Equivalent to looping LSTM_RNN.forward over the letters and keeping the
    last output: returns (final log_probs (1, N_OUTPUT), (h, c))."""
    logp_pad, h, c = _run_fused(letter_indices.astype(jnp.int32), h0, kern)
    return logp_pad[:, :N_OUTPUT], (h, c)


def lstm_rnn_forward(kern, x, hidden):
    """Single-step forward with the module's signature (B=1, one-hot x)."""
    h_prev = hidden[0] if isinstance(hidden, (tuple, list)) else hidden
    idx = jnp.argmax(x, axis=1).astype(jnp.int32)        # one-hot -> letter index
    logp_pad, h, c = _run_fused(idx, h_prev, kern)
    return logp_pad[:, :N_OUTPUT], (h, c)


# ---------------------------------------------------------------------------
# Parameter init (torch layout) + repack into the kernel layout.
# ---------------------------------------------------------------------------
def init_params(key, input_size=N_LETTERS, hidden_size=N_HIDDEN, output_size=N_OUTPUT):
    d_in = input_size + hidden_size
    k_lstm = 1.0 / math.sqrt(hidden_size)
    k_lin = 1.0 / math.sqrt(d_in)
    k1, k2, k3, k4, k5 = jax.random.split(key, 5)
    # nn.LSTMCell(d_in, H): weight_ih (4H, d_in), biases (4H,).  weight_hh only
    # multiplies the (always-zero) cell-call state -> contributes nothing, but
    # b_hh still adds, so it is folded into the gate bias below.
    w_ih = jax.random.uniform(k1, (4 * hidden_size, d_in), jnp.float32, -k_lstm, k_lstm)
    b_ih = jax.random.uniform(k2, (4 * hidden_size,), jnp.float32, -k_lstm, k_lstm)
    b_hh = jax.random.uniform(k3, (4 * hidden_size,), jnp.float32, -k_lstm, k_lstm)
    # nn.Linear(d_in, O)
    w_o = jax.random.uniform(k4, (output_size, d_in), jnp.float32, -k_lin, k_lin)
    b_o = jax.random.uniform(k5, (output_size,), jnp.float32, -k_lin, k_lin)
    raw = dict(w_ih=w_ih, b_ih=b_ih, b_hh=b_hh, w_o=w_o, b_o=b_o)

    # ---- kernel layout ------------------------------------------------------
    H = hidden_size
    # torch gate order [i, f, g, o]; drop the dead forget gate -> pack [i, g, o]
    keep = jnp.concatenate([jnp.arange(0, H), jnp.arange(2 * H, 3 * H),
                            jnp.arange(3 * H, 4 * H)])
    w_g = w_ih[keep]                                        # (3H, d_in)
    b_g = (b_ih + b_hh)[keep]                               # (3H,)
    rows_pad = ((input_size + 7) // 8) * 8                  # 64, sublane aligned
    w_xg = jnp.zeros((rows_pad, 3 * H), jnp.float32).at[:input_size].set(
        w_g[:, :input_size].T)                              # (64, 3H)  x-part (gathered)
    w_hg = jnp.asarray(w_g[:, input_size:].T)               # (H, 3H)   h-part (matmul)
    # output Linear, padded to 128 lanes; padded bias = NEG_BIG so those
    # columns contribute ~0 to the logsumexp and get sliced off in the wrapper.
    w_xo = jnp.zeros((rows_pad, O_PAD), jnp.float32).at[:input_size, :output_size].set(
        w_o[:, :input_size].T)
    w_ho = jnp.zeros((H, O_PAD), jnp.float32).at[:, :output_size].set(
        w_o[:, input_size:].T)
    b_o_pad = jnp.full((1, O_PAD), NEG_BIG, jnp.float32).at[0, :output_size].set(b_o)
    kern = dict(w_xg=w_xg, w_hg=w_hg, b_g=b_g.reshape(1, -1),
                w_xo=w_xo, w_ho=w_ho, b_o=b_o_pad)
    return kern, raw


# ---------------------------------------------------------------------------
# Pure-JAX reference (torch semantics, step by step) for validation.
# ---------------------------------------------------------------------------
def _ref_forward_step(raw, x, h_prev):
    H = N_HIDDEN
    combined = jnp.concatenate([x, h_prev], axis=1)                       # (1, d_in)
    gates = (jnp.dot(combined, raw["w_ih"].T, precision=jax.lax.Precision.HIGHEST)
             + raw["b_ih"] + raw["b_hh"])                                 # zero cell state
    i = jax.nn.sigmoid(gates[:, 0:H])
    f = jax.nn.sigmoid(gates[:, H:2 * H])
    g = jnp.tanh(gates[:, 2 * H:3 * H])
    o = jax.nn.sigmoid(gates[:, 3 * H:4 * H])
    c = f * 0.0 + i * g
    h = o * jnp.tanh(c)
    logits = (jnp.dot(combined, raw["w_o"].T, precision=jax.lax.Precision.HIGHEST)
              + raw["b_o"])
    return jax.nn.log_softmax(logits, axis=1), (h, c)


if __name__ == "__main__":
    key = jax.random.PRNGKey(0)
    kern, raw = init_params(key)

    # input = lineToTensor('Albert') equivalent: per-letter indices (the one-hot
    # rows are reconstructed implicitly via the row gather inside the kernel).
    line = "Albert"
    letter_idx = jnp.array([letter_to_index(ch) for ch in line], jnp.int32)   # (6,)
    h0 = jnp.zeros((1, N_HIDDEN), jnp.float32)                                # initHidden()

    # fused kernel: whole name in ONE pallas_call
    logp, (h, c) = lstm_rnn_sequence(kern, letter_idx, h0)
    logp, h, c = jax.block_until_ready((logp, h, c))

    # reference: the original per-letter Python loop, in pure JAX
    x_seq = jax.nn.one_hot(letter_idx, N_LETTERS, dtype=jnp.float32)[:, None, :]
    hid = (h0, jnp.zeros_like(h0))
    ref_out = None
    for t in range(letter_idx.shape[0]):
        ref_out, hid = _ref_forward_step(raw, x_seq[t], hid[0])
    ref_logp, (ref_h, ref_c) = ref_out, hid

    assert logp.shape == (1, N_OUTPUT)
    assert h.shape == (1, N_HIDDEN) and c.shape == (1, N_HIDDEN)
    assert abs(float(jnp.sum(jnp.exp(logp))) - 1.0) < 1e-4
    # MXU f32 matmul vs XLA reference -> tiny numeric differences only
    assert jnp.allclose(logp, ref_logp, atol=5e-3, rtol=1e-3), "logp mismatch"
    assert jnp.allclose(h, ref_h, atol=5e-3, rtol=1e-3), "h mismatch"
    assert jnp.allclose(c, ref_c, atol=5e-3, rtol=1e-3), "c mismatch"

    # single-step API (== module.forward) on the first letter, vs reference
    logp1, (h1, c1) = lstm_rnn_forward(kern, x_seq[0], (h0, jnp.zeros_like(h0)))
    ref1, (rh1, rc1) = _ref_forward_step(raw, x_seq[0], h0)
    logp1 = jax.block_until_ready(logp1)
    assert jnp.allclose(logp1, ref1, atol=5e-3, rtol=1e-3)
    assert jnp.allclose(h1, rh1, atol=5e-3, rtol=1e-3)

    print("KERNEL_OK")
</pallas_src>

<mosaic_0001>
module attributes {stable_mosaic.version = 11 : i64} {
  func.func @_lstm_rnn_seq_kernel(%arg0: memref<6xi32, #tpu.memory_space<smem>>, %arg1: memref<1x128xf32, #tpu.memory_space<vmem>>, %arg2: memref<64x384xf32, #tpu.memory_space<vmem>>, %arg3: memref<128x384xf32, #tpu.memory_space<vmem>>, %arg4: memref<1x384xf32, #tpu.memory_space<vmem>>, %arg5: memref<64x128xf32, #tpu.memory_space<vmem>>, %arg6: memref<128x128xf32, #tpu.memory_space<vmem>>, %arg7: memref<1x128xf32, #tpu.memory_space<vmem>>, %arg8: memref<1x128xf32, #tpu.memory_space<vmem>>, %arg9: memref<1x128xf32, #tpu.memory_space<vmem>>, %arg10: memref<1x128xf32, #tpu.memory_space<vmem>>) attributes {dimension_semantics = [], scalar_prefetch = 0 : i64, scratch_operands = 0 : i64, tpu.core_type = #tpu.core_type<tc>} {
    %c0 = arith.constant 0 : index
    %c0_0 = arith.constant 0 : index
    %0 = vector.load %arg3[%c0, %c0_0] : memref<128x384xf32, #tpu.memory_space<vmem>>, vector<128x384xf32>
    %c0_1 = arith.constant 0 : index
    %c0_2 = arith.constant 0 : index
    %1 = vector.load %arg4[%c0_1, %c0_2] : memref<1x384xf32, #tpu.memory_space<vmem>>, vector<1x384xf32>
    %c0_3 = arith.constant 0 : index
    %c0_4 = arith.constant 0 : index
    %2 = vector.load %arg1[%c0_3, %c0_4] : memref<1x128xf32, #tpu.memory_space<vmem>>, vector<1x128xf32>
    %c0_i32 = arith.constant 0 : i32
    %3 = arith.index_cast %c0_i32 : i32 to index
    %4 = memref.load %arg0[%3] : memref<6xi32, #tpu.memory_space<smem>>
    %5 = arith.index_cast %4 : i32 to index
    %c0_5 = arith.constant 0 : index
    %6 = vector.load %arg2[%5, %c0_5] : memref<64x384xf32, #tpu.memory_space<vmem>>, vector<1x384xf32>
    %cst = arith.constant dense<0.000000e+00> : vector<1x384xf32>
    %7 = tpu.matmul %2, %0, %cst {dimension_numbers = #tpu.dot_dimension_numbers<[1], [0], [0], [1], [0, 0, 1, 1], [], []>} : vector<1x128xf32>, vector<128x384xf32>, vector<1x384xf32> -> vector<1x384xf32>
    %8 = arith.addf %6, %7 : vector<1x384xf32>
    %9 = arith.addf %8, %1 : vector<1x384xf32>
    %10 = vector.extract_strided_slice %9 {offsets = [0, 0], sizes = [1, 128], strides = [1, 1]} : vector<1x384xf32> to vector<1x128xf32>
    %11 = arith.negf %10 : vector<1x128xf32>
    %12 = math.exp %11 : vector<1x128xf32>
    %cst_6 = arith.constant 1.000000e+00 : f32
    %13 = vector.broadcast %cst_6 : f32 to vector<1x128xf32>
    %14 = arith.addf %13, %12 : vector<1x128xf32>
    %15 = arith.divf %13, %14 : vector<1x128xf32>
    %16 = vector.extract_strided_slice %9 {offsets = [0, 128], sizes = [1, 128], strides = [1, 1]} : vector<1x384xf32> to vector<1x128xf32>
    %17 = math.tanh %16 : vector<1x128xf32>
    %18 = vector.extract_strided_slice %9 {offsets = [0, 256], sizes = [1, 128], strides = [1, 1]} : vector<1x384xf32> to vector<1x128xf32>
    %19 = arith.negf %18 : vector<1x128xf32>
    %20 = math.exp %19 : vector<1x128xf32>
    %cst_7 = arith.constant 1.000000e+00 : f32
    %21 = vector.broadcast %cst_7 : f32 to vector<1x128xf32>
    %22 = arith.addf %21, %20 : vector<1x128xf32>
    %23 = arith.divf %21, %22 : vector<1x128xf32>
    %24 = arith.mulf %15, %17 : vector<1x128xf32>
    %25 = math.tanh %24 : vector<1x128xf32>
    %26 = arith.mulf %23, %25 : vector<1x128xf32>
    %c1_i32 = arith.constant 1 : i32
    %27 = arith.index_cast %c1_i32 : i32 to index
    %28 = memref.load %arg0[%27] : memref<6xi32, #tpu.memory_space<smem>>
    %29 = arith.index_cast %28 : i32 to index
    %c0_8 = arith.constant 0 : index
    %30 = vector.load %arg2[%29, %c0_8] : memref<64x384xf32, #tpu.memory_space<vmem>>, vector<1x384xf32>
    %cst_9 = arith.constant dense<0.000000e+00> : vector<1x384xf32>
    %31 = tpu.matmul %26, %0, %cst_9 {dimension_numbers = #tpu.dot_dimension_numbers<[1], [0], [0], [1], [0, 0, 1, 1], [], []>} : vector<1x128xf32>, vector<128x384xf32>, vector<1x384xf32> -> vector<1x384xf32>
    %32 = arith.addf %30, %31 : vector<1x384xf32>
    %33 = arith.addf %32, %1 : vector<1x384xf32>
    %34 = vector.extract_strided_slice %33 {offsets = [0, 0], sizes = [1, 128], strides = [1, 1]} : vector<1x384xf32> to vector<1x128xf32>
    %35 = arith.negf %34 : vector<1x128xf32>
    %36 = math.exp %35 : vector<1x128xf32>
    %cst_10 = arith.constant 1.000000e+00 : f32
    %37 = vector.broadcast %cst_10 : f32 to vector<1x128xf32>
    %38 = arith.addf %37, %36 : vector<1x128xf32>
    %39 = arith.divf %37, %38 : vector<1x128xf32>
    %40 = vector.extract_strided_slice %33 {offsets = [0, 128], sizes = [1, 128], strides = [1, 1]} : vector<1x384xf32> to vector<1x128xf32>
    %41 = math.tanh %40 : vector<1x128xf32>
    %42 = vector.extract_strided_slice %33 {offsets = [0, 256], sizes = [1, 128], strides = [1, 1]} : vector<1x384xf32> to vector<1x128xf32>
    %43 = arith.negf %42 : vector<1x128xf32>
    %44 = math.exp %43 : vector<1x128xf32>
    %cst_11 = arith.constant 1.000000e+00 : f32
    %45 = vector.broadcast %cst_11 : f32 to vector<1x128xf32>
    %46 = arith.addf %45, %44 : vector<1x128xf32>
    %47 = arith.divf %45, %46 : vector<1x128xf32>
    %48 = arith.mulf %39, %41 : vector<1x128xf32>
    %49 = math.tanh %48 : vector<1x128xf32>
    %50 = arith.mulf %47, %49 : vector<1x128xf32>
    %c2_i32 = arith.constant 2 : i32
    %51 = arith.index_cast %c2_i32 : i32 to index
    %52 = memref.load %arg0[%51] : memref<6xi32, #tpu.memory_space<smem>>
    %53 = arith.index_cast %52 : i32 to index
    %c0_12 = arith.constant 0 : index
    %54 = vector.load %arg2[%53, %c0_12] : memref<64x384xf32, #tpu.memory_space<vmem>>, vector<1x384xf32>
    %cst_13 = arith.constant dense<0.000000e+00> : vector<1x384xf32>
    %55 = tpu.matmul %50, %0, %cst_13 {dimension_numbers = #tpu.dot_dimension_numbers<[1], [0], [0], [1], [0, 0, 1, 1], [], []>} : vector<1x128xf32>, vector<128x384xf32>, vector<1x384xf32> -> vector<1x384xf32>
    %56 = arith.addf %54, %55 : vector<1x384xf32>
    %57 = arith.addf %56, %1 : vector<1x384xf32>
    %58 = vector.extract_strided_slice %57 {offsets = [0, 0], sizes = [1, 128], strides = [1, 1]} : vector<1x384xf32> to vector<1x128xf32>
    %59 = arith.negf %58 : vector<1x128xf32>
    %60 = math.exp %59 : vector<1x128xf32>
    %cst_14 = arith.constant 1.000000e+00 : f32
    %61 = vector.broadcast %cst_14 : f32 to vector<1x128xf32>
    %62 = arith.addf %61, %60 : vector<1x128xf32>
    %63 = arith.divf %61, %62 : vector<1x128xf32>
    %64 = vector.extract_strided_slice %57 {offsets = [0, 128], sizes = [1, 128], strides = [1, 1]} : vector<1x384xf32> to vector<1x128xf32>
    %65 = math.tanh %64 : vector<1x128xf32>
    %66 = vector.extract_strided_slice %57 {offsets = [0, 256], sizes = [1, 128], strides = [1, 1]} : vector<1x384xf32> to vector<1x128xf32>
    %67 = arith.negf %66 : vector<1x128xf32>
    %68 = math.exp %67 : vector<1x128xf32>
    %cst_15 = arith.constant 1.000000e+00 : f32
    %69 = vector.broadcast %cst_15 : f32 to vector<1x128xf32>
    %70 = arith.addf %69, %68 : vector<1x128xf32>
    %71 = arith.divf %69, %70 : vector<1x128xf32>
    %72 = arith.mulf %63, %65 : vector<1x128xf32>
    %73 = math.tanh %72 : vector<1x128xf32>
    %74 = arith.mulf %71, %73 : vector<1x128xf32>
    %c3_i32 = arith.constant 3 : i32
    %75 = arith.index_cast %c3_i32 : i32 to index
    %76 = memref.load %arg0[%75] : memref<6xi32, #tpu.memory_space<smem>>
    %77 = arith.index_cast %76 : i32 to index
    %c0_16 = arith.constant 0 : index
    %78 = vector.load %arg2[%77, %c0_16] : memref<64x384xf32, #tpu.memory_space<vmem>>, vector<1x384xf32>
    %cst_17 = arith.constant dense<0.000000e+00> : vector<1x384xf32>
    %79 = tpu.matmul %74, %0, %cst_17 {dimension_numbers = #tpu.dot_dimension_numbers<[1], [0], [0], [1], [0, 0, 1, 1], [], []>} : vector<1x128xf32>, vector<128x384xf32>, vector<1x384xf32> -> vector<1x384xf32>
    %80 = arith.addf %78, %79 : vector<1x384xf32>
    %81 = arith.addf %80, %1 : vector<1x384xf32>
    %82 = vector.extract_strided_slice %81 {offsets = [0, 0], sizes = [1, 128], strides = [1, 1]} : vector<1x384xf32> to vector<1x128xf32>
    %83 = arith.negf %82 : vector<1x128xf32>
    %84 = math.exp %83 : vector<1x128xf32>
    %cst_18 = arith.constant 1.000000e+00 : f32
    %85 = vector.broadcast %cst_18 : f32 to vector<1x128xf32>
    %86 = arith.addf %85, %84 : vector<1x128xf32>
    %87 = arith.divf %85, %86 : vector<1x128xf32>
    %88 = vector.extract_strided_slice %81 {offsets = [0, 128], sizes = [1, 128], strides = [1, 1]} : vector<1x384xf32> to vector<1x128xf32>
    %89 = math.tanh %88 : vector<1x128xf32>
    %90 = vector.extract_strided_slice %81 {offsets = [0, 256], sizes = [1, 128], strides = [1, 1]} : vector<1x384xf32> to vector<1x128xf32>
    %91 = arith.negf %90 : vector<1x128xf32>
    %92 = math.exp %91 : vector<1x128xf32>
    %cst_19 = arith.constant 1.000000e+00 : f32
    %93 = vector.broadcast %cst_19 : f32 to vector<1x128xf32>
    %94 = arith.addf %93, %92 : vector<1x128xf32>
    %95 = arith.divf %93, %94 : vector<1x128xf32>
    %96 = arith.mulf %87, %89 : vector<1x128xf32>
    %97 = math.tanh %96 : vector<1x128xf32>
    %98 = arith.mulf %95, %97 : vector<1x128xf32>
    %c4_i32 = arith.constant 4 : i32
    %99 = arith.index_cast %c4_i32 : i32 to index
    %100 = memref.load %arg0[%99] : memref<6xi32, #tpu.memory_space<smem>>
    %101 = arith.index_cast %100 : i32 to index
    %c0_20 = arith.constant 0 : index
    %102 = vector.load %arg2[%101, %c0_20] : memref<64x384xf32, #tpu.memory_space<vmem>>, vector<1x384xf32>
    %cst_21 = arith.constant dense<0.000000e+00> : vector<1x384xf32>
    %103 = tpu.matmul %98, %0, %cst_21 {dimension_numbers = #tpu.dot_dimension_numbers<[1], [0], [0], [1], [0, 0, 1, 1], [], []>} : vector<1x128xf32>, vector<128x384xf32>, vector<1x384xf32> -> vector<1x384xf32>
    %104 = arith.addf %102, %103 : vector<1x384xf32>
    %105 = arith.addf %104, %1 : vector<1x384xf32>
    %106 = vector.extract_strided_slice %105 {offsets = [0, 0], sizes = [1, 128], strides = [1, 1]} : vector<1x384xf32> to vector<1x128xf32>
    %107 = arith.negf %106 : vector<1x128xf32>
    %108 = math.exp %107 : vector<1x128xf32>
    %cst_22 = arith.constant 1.000000e+00 : f32
    %109 = vector.broadcast %cst_22 : f32 to vector<1x128xf32>
    %110 = arith.addf %109, %108 : vector<1x128xf32>
    %111 = arith.divf %109, %110 : vector<1x128xf32>
    %112 = vector.extract_strided_slice %105 {offsets = [0, 128], sizes = [1, 128], strides = [1, 1]} : vector<1x384xf32> to vector<1x128xf32>
    %113 = math.tanh %112 : vector<1x128xf32>
    %114 = vector.extract_strided_slice %105 {offsets = [0, 256], sizes = [1, 128], strides = [1, 1]} : vector<1x384xf32> to vector<1x128xf32>
    %115 = arith.negf %114 : vector<1x128xf32>
    %116 = math.exp %115 : vector<1x128xf32>
    %cst_23 = arith.constant 1.000000e+00 : f32
    %117 = vector.broadcast %cst_23 : f32 to vector<1x128xf32>
    %118 = arith.addf %117, %116 : vector<1x128xf32>
    %119 = arith.divf %117, %118 : vector<1x128xf32>
    %120 = arith.mulf %111, %113 : vector<1x128xf32>
    %121 = math.tanh %120 : vector<1x128xf32>
    %122 = arith.mulf %119, %121 : vector<1x128xf32>
    %c5_i32 = arith.constant 5 : i32
    %c5 = arith.constant 5 : index
    %123 = memref.load %arg0[%c5] : memref<6xi32, #tpu.memory_space<smem>>
    %124 = arith.index_cast %123 : i32 to index
    %c0_24 = arith.constant 0 : index
    %125 = vector.load %arg2[%124, %c0_24] : memref<64x384xf32, #tpu.memory_space<vmem>>, vector<1x384xf32>
    %cst_25 = arith.constant dense<0.000000e+00> : vector<1x384xf32>
    %126 = tpu.matmul %122, %0, %cst_25 {dimension_numbers = #tpu.dot_dimension_numbers<[1], [0], [0], [1], [0, 0, 1, 1], [], []>} : vector<1x128xf32>, vector<128x384xf32>, vector<1x384xf32> -> vector<1x384xf32>
    %127 = arith.addf %125, %126 : vector<1x384xf32>
    %128 = arith.addf %127, %1 : vector<1x384xf32>
    %129 = vector.extract_strided_slice %128 {offsets = [0, 0], sizes = [1, 128], strides = [1, 1]} : vector<1x384xf32> to vector<1x128xf32>
    %130 = arith.negf %129 : vector<1x128xf32>
    %131 = math.exp %130 : vector<1x128xf32>
    %cst_26 = arith.constant 1.000000e+00 : f32
    %132 = vector.broadcast %cst_26 : f32 to vector<1x128xf32>
    %133 = arith.addf %132, %131 : vector<1x128xf32>
    %134 = arith.divf %132, %133 : vector<1x128xf32>
    %135 = vector.extract_strided_slice %128 {offsets = [0, 128], sizes = [1, 128], strides = [1, 1]} : vector<1x384xf32> to vector<1x128xf32>
    %136 = math.tanh %135 : vector<1x128xf32>
    %137 = vector.extract_strided_slice %128 {offsets = [0, 256], sizes = [1, 128], strides = [1, 1]} : vector<1x384xf32> to vector<1x128xf32>
    %138 = arith.negf %137 : vector<1x128xf32>
    %139 = math.exp %138 : vector<1x128xf32>
    %cst_27 = arith.constant 1.000000e+00 : f32
    %140 = vector.broadcast %cst_27 : f32 to vector<1x128xf32>
    %141 = arith.addf %140, %139 : vector<1x128xf32>
    %142 = arith.divf %140, %141 : vector<1x128xf32>
    %143 = arith.mulf %134, %136 : vector<1x128xf32>
    %144 = math.tanh %143 : vector<1x128xf32>
    %145 = arith.mulf %142, %144 : vector<1x128xf32>
    %146 = arith.index_cast %123 : i32 to index
    %c0_28 = arith.constant 0 : index
    %147 = vector.load %arg5[%146, %c0_28] : memref<64x128xf32, #tpu.memory_space<vmem>>, vector<1x128xf32>
    %c0_29 = arith.constant 0 : index
    %c0_30 = arith.constant 0 : index
    %148 = vector.load %arg6[%c0_29, %c0_30] : memref<128x128xf32, #tpu.memory_space<vmem>>, vector<128x128xf32>
    %cst_31 = arith.constant dense<0.000000e+00> : vector<1x128xf32>
    %149 = tpu.matmul %122, %148, %cst_31 {dimension_numbers = #tpu.dot_dimension_numbers<[1], [0], [0], [1], [0, 0, 1, 1], [], []>} : vector<1x128xf32>, vector<128x128xf32>, vector<1x128xf32> -> vector<1x128xf32>
    %150 = arith.addf %147, %149 : vector<1x128xf32>
    %c0_32 = arith.constant 0 : index
    %c0_33 = arith.constant 0 : index
    %151 = vector.load %arg7[%c0_32, %c0_33] : memref<1x128xf32, #tpu.memory_space<vmem>>, vector<1x128xf32>
    %152 = arith.addf %150, %151 : vector<1x128xf32>
    %cst_34 = arith.constant dense<0xFF800000> : vector<1xf32>
    %153 = vector.multi_reduction <maximumf>, %152, %cst_34 [1] : vector<1x128xf32> to vector<1xf32>
    %154 = vector.shape_cast %153 : vector<1xf32> to vector<1x1xf32>
    %155 = vector.broadcast %154 : vector<1x1xf32> to vector<1x128xf32>
    %156 = arith.subf %152, %155 : vector<1x128xf32>
    %157 = math.exp %156 : vector<1x128xf32>
    %cst_35 = arith.constant dense<0.000000e+00> : vector<1xf32>
    %158 = vector.multi_reduction <add>, %157, %cst_35 [1] : vector<1x128xf32> to vector<1xf32>
    %159 = vector.shape_cast %158 : vector<1xf32> to vector<1x1xf32>
    %160 = vector.broadcast %154 : vector<1x1xf32> to vector<1x128xf32>
    %161 = arith.subf %152, %160 : vector<1x128xf32>
    %162 = math.log %159 : vector<1x1xf32>
    %163 = vector.broadcast %162 : vector<1x1xf32> to vector<1x128xf32>
    %164 = arith.subf %161, %163 : vector<1x128xf32>
    %c0_36 = arith.constant 0 : index
    %c0_37 = arith.constant 0 : index
    %165 = vector.load %arg8[%c0_36, %c0_37] : memref<1x128xf32, #tpu.memory_space<vmem>>, vector<1x128xf32>
    tpu.vector_store %arg8[%c0_36, %c0_37], %164 {strides = array<i32>} : memref<1x128xf32, #tpu.memory_space<vmem>>, vector<1x128xf32>,
    %c0_38 = arith.constant 0 : index
    %c0_39 = arith.constant 0 : index
    %166 = vector.load %arg9[%c0_38, %c0_39] : memref<1x128xf32, #tpu.memory_space<vmem>>, vector<1x128xf32>
    tpu.vector_store %arg9[%c0_38, %c0_39], %145 {strides = array<i32>} : memref<1x128xf32, #tpu.memory_space<vmem>>, vector<1x128xf32>,
    %c0_40 = arith.constant 0 : index
    %c0_41 = arith.constant 0 : index
    %167 = vector.load %arg10[%c0_40, %c0_41] : memref<1x128xf32, #tpu.memory_space<vmem>>, vector<1x128xf32>
    tpu.vector_store %arg10[%c0_40, %c0_41], %143 {strides = array<i32>} : memref<1x128xf32, #tpu.memory_space<vmem>>, vector<1x128xf32>,
    return
  }
}

</mosaic_0001>

<llo_original>
// kernel: _run_fused.1
$region0: #{_run_fused.1}
  #allocation0 [shape = 'u32[]', space=smem, size = 0x4, offset = 0x4, fixed_abs, tag = 'smem constant byte address 0x4 - core index']
  #allocation1 [shape = 'u32[144,128]{1,0:T(1,128)}', space=vmem, size = 0x12000, scoped, tag = 'internal scratch']
  %s0 = inlined_call_operand.hbm [shape: s32[6], index: 0, kind: input, shape index: {}]
  %s1 = inlined_call_operand.vmem [shape: f32[1,128], index: 1, kind: input, shape index: {}]
  %s2 = inlined_call_operand.hbm [shape: f32[64,384], index: 2, kind: input, shape index: {}]
  %s3 = inlined_call_operand.hbm [shape: f32[128,384], index: 3, kind: input, shape index: {}]
  %s4 = inlined_call_operand.vmem [shape: f32[1,384], index: 4, kind: input, shape index: {}]
  %s5 = inlined_call_operand.hbm [shape: f32[64,128], index: 5, kind: input, shape index: {}]
  %s6 = inlined_call_operand.hbm [shape: f32[128,128], index: 6, kind: input, shape index: {}]
  %s7 = inlined_call_operand.vmem [shape: f32[1,128], index: 7, kind: input, shape index: {}]
  %s8 = inlined_call_operand.hbm [shape: f32[1,128], index: 8, kind: output, shape index: {0}]
  %s9 = inlined_call_operand.hbm [shape: f32[1,128], index: 9, kind: output, shape index: {1}]
  %s10 = inlined_call_operand.hbm [shape: f32[1,128], index: 10, kind: output, shape index: {2}]
  %11 = xla_tuple %s8, %s9, %s10
  %s12 = sld [smem:[#allocation0]]
  $region78: #{_run_fused.1} parent=0
    _
  %s14 = ssub.s32 1, %s12
  %s15 = scalar_select 0, %s14, %s12
  $region1: #{_run_fused.1} parent=0
    #allocation2 [shape = 'u8[512]{0}', space=smem, size = 0x200, scoped, tag = 'input window, operand 0, single buffered']
    #allocation3 [shape = 's32[1]{0}', space=sflag, size = 0x4, scoped, tag = 'scoped memory for _run_fused.1']
    #allocation4 [shape = 's32[1]{0}', space=sflag, size = 0x4, scoped, tag = 'scoped memory for _run_fused.1']
    #allocation5 [shape = 's32[1]{0}', space=sflag, size = 0x4, scoped, tag = 'scoped memory for _run_fused.1']
    #allocation6 [shape = 'u8[98304]{0}', space=vmem, size = 0x18000, scoped, tag = 'input window, operand 2, single buffered']
    #allocation7 [shape = 'u8[196608]{0}', space=vmem, size = 0x30000, scoped, tag = 'input window, operand 3, single buffered']
    #allocation8 [shape = 's32[1]{0}', space=sflag, size = 0x4, scoped, tag = 'scoped memory for _run_fused.1']
    #allocation9 [shape = 'u8[32768]{0}', space=vmem, size = 0x8000, scoped, tag = 'input window, operand 5, single buffered']
    #allocation10 [shape = 'u8[65536]{0}', space=vmem, size = 0x10000, scoped, tag = 'input window, operand 6, single buffered']
    #allocation11 [shape = 's32[1]{0}', space=sflag, size = 0x4, scoped, tag = 'scoped memory for _run_fused.1']
    #allocation12 [shape = 'u8[512]{0}', space=vmem, size = 0x400, scoped, tag = 'output window, operand 0, single buffered']
    #allocation13 [shape = 'u8[512]{0}', space=vmem, size = 0x400, scoped, tag = 'output window, operand 1, single buffered']
    #allocation14 [shape = 's32[1]{0}', space=sflag, size = 0x4, scoped, tag = 'scoped memory for _run_fused.1']
    #allocation15 [shape = 'u8[512]{0}', space=vmem, size = 0x400, scoped, tag = 'output window, operand 2, single buffered']
    %16 = vsyncpa [#allocation5], 0
    %17 = vsyncpa [#allocation3], 0
    %18 = vsyncpa [#allocation8], 0
    %19 = vsyncpa [#allocation11], 0
    %20 = vsyncpa [#allocation4], 0
    %21 = vsyncpa [#allocation14], 0
    // Predicated region
    $region2: #{_run_fused.1} parent=1 // pred_check
      _
    $region3: #{_run_fused.1} parent=1 // pred_check_branch
      %23 = sbr.rel (0) target = $region5
    $region4: #{_run_fused.1} parent=1 // pred_region
      %s25 = ssub.s32 16, 16
      %26 = vsyncadd [#allocation5], %s25
      %29 = dma.hbm_to_smem %s0, 16, [#allocation2], [#allocation5]
    $region5: #{_run_fused.1} parent=1 // pred_fallthru
      _
    // Predicated region
    $region6: #{_run_fused.1} parent=1 // pred_check
      _
    $region7: #{_run_fused.1} parent=1 // pred_check_branch
      %31 = sbr.rel (0) target = $region9
    $region8: #{_run_fused.1} parent=1 // pred_region
      _
    $region9: #{_run_fused.1} parent=1 // pred_fallthru
      _
    // Predicated region
    $region10: #{_run_fused.1} parent=1 // pred_check
      _
    $region11: #{_run_fused.1} parent=1 // pred_check_branch
      %33 = sbr.rel (0) target = $region13
    $region12: #{_run_fused.1} parent=1 // pred_region
      %s35 = ssub.s32 3072, 3072
      %36 = vsyncadd [#allocation3], %s35
      %s37 = sshll.u32 [#allocation6], 4
      %s38 = int_to_ptr.vmem [resolvable:$true] %s37
      %43 = dma.hbm_to_vmem [thread:$0]  %s2, 3072, %s38, [#allocation3], 384, 384, 24
    $region13: #{_run_fused.1} parent=1 // pred_fallthru
      _
    // Predicated region
    $region14: #{_run_fused.1} parent=1 // pred_check
      _
    $region15: #{_run_fused.1} parent=1 // pred_check_branch
      %45 = sbr.rel (0) target = $region17
    $region16: #{_run_fused.1} parent=1 // pred_region
      %s47 = ssub.s32 6144, 6144
      %48 = vsyncadd [#allocation8], %s47
      %s49 = sshll.u32 [#allocation7], 4
      %s50 = int_to_ptr.vmem [resolvable:$true] %s49
      %55 = dma.hbm_to_vmem [thread:$0]  %s3, 6144, %s50, [#allocation8], 384, 384, 24
    $region17: #{_run_fused.1} parent=1 // pred_fallthru
      _
    // Predicated region
    $region18: #{_run_fused.1} parent=1 // pred_check
      _
    $region19: #{_run_fused.1} parent=1 // pred_check_branch
      %57 = sbr.rel (0) target = $region21
    $region20: #{_run_fused.1} parent=1 // pred_region
      _
    $region21: #{_run_fused.1} parent=1 // pred_fallthru
      _
    // Predicated region
    $region22: #{_run_fused.1} parent=1 // pred_check
      _
    $region23: #{_run_fused.1} parent=1 // pred_check_branch
      %59 = sbr.rel (0) target = $region25
    $region24: #{_run_fused.1} parent=1 // pred_region
      %s61 = ssub.s32 1024, 1024
      %62 = vsyncadd [#allocation8], %s61
      %s63 = sshll.u32 [#allocation9], 4
      %s64 = int_to_ptr.vmem [resolvable:$true] %s63
      %69 = dma.hbm_to_vmem [thread:$0]  %s5, 1024, %s64, [#allocation8], 128, 128, 8
    $region25: #{_run_fused.1} parent=1 // pred_fallthru
      _
    // Predicated region
    $region26: #{_run_fused.1} parent=1 // pred_check
      _
    $region27: #{_run_fused.1} parent=1 // pred_check_branch
      %71 = sbr.rel (0) target = $region29
    $region28: #{_run_fused.1} parent=1 // pred_region
      %s73 = ssub.s32 2048, 2048
      %74 = vsyncadd [#allocation11], %s73
      %s75 = sshll.u32 [#allocation10], 4
      %s76 = int_to_ptr.vmem [resolvable:$true] %s75
      %81 = dma.hbm_to_vmem [thread:$0]  %s6, 2048, %s76, [#allocation11], 128, 128, 8
    $region29: #{_run_fused.1} parent=1 // pred_fallthru
      _
    // Predicated region
    $region30: #{_run_fused.1} parent=1 // pred_check
      _
    $region31: #{_run_fused.1} parent=1 // pred_check_branch
      %83 = sbr.rel (0) target = $region33
    $region32: #{_run_fused.1} parent=1 // pred_region
      _
    $region33: #{_run_fused.1} parent=1 // pred_fallthru
      _
    // Predicated region
    $region34: #{_run_fused.1} parent=1 // pred_check
      _
    $region35: #{_run_fused.1} parent=1 // pred_check_branch
      %85 = sbr.rel (0) target = $region37
    $region36: #{_run_fused.1} parent=1 // pred_region
      %86 = dma.done [#allocation5], 16
    $region37: #{_run_fused.1} parent=1 // pred_fallthru
      _
    // Predicated region
    $region38: #{_run_fused.1} parent=1 // pred_check
      _
    $region39: #{_run_fused.1} parent=1 // pred_check_branch
      %88 = sbr.rel (0) target = $region41
    $region40: #{_run_fused.1} parent=1 // pred_region
      %89 = dma.done [#allocation3], 3072
    $region41: #{_run_fused.1} parent=1 // pred_fallthru
      _
    // Predicated region
    $region42: #{_run_fused.1} parent=1 // pred_check
      _
    $region43: #{_run_fused.1} parent=1 // pred_check_branch
      %91 = sbr.rel (0) target = $region45
    $region44: #{_run_fused.1} parent=1 // pred_region
      %92 = dma.done [#allocation8], 6144
    $region45: #{_run_fused.1} parent=1 // pred_fallthru
      _
    // Predicated region
    $region46: #{_run_fused.1} parent=1 // pred_check
      _
    $region47: #{_run_fused.1} parent=1 // pred_check_branch
      %94 = sbr.rel (0) target = $region49
    $region48: #{_run_fused.1} parent=1 // pred_region
      %95 = dma.done [#allocation8], 1024
    $region49: #{_run_fused.1} parent=1 // pred_fallthru
      _
    // Predicated region
    $region50: #{_run_fused.1} parent=1 // pred_check
      _
    $region51: #{_run_fused.1} parent=1 // pred_check_branch
      %97 = sbr.rel (0) target = $region53
    $region52: #{_run_fused.1} parent=1 // pred_region
      %98 = dma.done [#allocation11], 2048
    $region53: #{_run_fused.1} parent=1 // pred_fallthru
      _
    %99 = sfence
    %v100 = vld [vmem:[#allocation7] sm:$0xff]
    %v101 = vld [vmem:[#allocation7 + $0x8] sm:$0xff]
    %v102 = vld [vmem:[#allocation7 + $0x10] sm:$0xff]
    %v103 = vld [vmem:[#allocation7 + $0x18] sm:$0xff]
    %v104 = vld [vmem:[#allocation7 + $0x20] sm:$0xff]
    %v105 = vld [vmem:[#allocation7 + $0x28] sm:$0xff]
    %v106 = vld [vmem:[#allocation7 + $0x30] sm:$0xff]
    %v107 = vld [vmem:[#allocation7 + $0x38] sm:$0xff]
    %v108 = vld [vmem:[#allocation7 + $0x40] sm:$0xff]
    %v109 = vld [vmem:[#allocation7 + $0x48] sm:$0xff]
    %v110 = vld [vmem:[#allocation7 + $0x50] sm:$0xff]
    %v111 = vld [vmem:[#allocation7 + $0x58] sm:$0xff]
    %v112 = vld [vmem:[#allocation7 + $0x60] sm:$0xff]
    %v113 = vld [vmem:[#allocation7 + $0x68] sm:$0xff]
    %v114 = vld [vmem:[#allocation7 + $0x70] sm:$0xff]
    %v115 = vld [vmem:[#allocation7 + $0x78] sm:$0xff]
    %v116 = vld [vmem:[#allocation7 + $0x80] sm:$0xff]
    %v117 = vld [vmem:[#allocation7 + $0x88] sm:$0xff]
    %v118 = vld [vmem:[#allocation7 + $0x90] sm:$0xff]
    %v119 = vld [vmem:[#allocation7 + $0x98] sm:$0xff]
    %v120 = vld [vmem:[#allocation7 + $0xa0] sm:$0xff]
    %v121 = vld [vmem:[#allocation7 + $0xa8] sm:$0xff]
    %v122 = vld [vmem:[#allocation7 + $0xb0] sm:$0xff]
    %v123 = vld [vmem:[#allocation7 + $0xb8] sm:$0xff]
    %v124 = vld [vmem:[#allocation7 + $0xc0] sm:$0xff]
    %v125 = vld [vmem:[#allocation7 + $0xc8] sm:$0xff]
    %v126 = vld [vmem:[#allocation7 + $0xd0] sm:$0xff]
    %v127 = vld [vmem:[#allocation7 + $0xd8] sm:$0xff]
    %v128 = vld [vmem:[#allocation7 + $0xe0] sm:$0xff]
    %v129 = vld [vmem:[#allocation7 + $0xe8] sm:$0xff]
    %v130 = vld [vmem:[#allocation7 + $0xf0] sm:$0xff]
    %v131 = vld [vmem:[#allocation7 + $0xf8] sm:$0xff]
    %v132 = vld [vmem:[#allocation7 + $0x100] sm:$0xff]
    %v133 = vld [vmem:[#allocation7 + $0x108] sm:$0xff]
    %v134 = vld [vmem:[#allocation7 + $0x110] sm:$0xff]
    %v135 = vld [vmem:[#allocation7 + $0x118] sm:$0xff]
    %v136 = vld [vmem:[#allocation7 + $0x120] sm:$0xff]
    %v137 = vld [vmem:[#allocation7 + $0x128] sm:$0xff]
    %v138 = vld [vmem:[#allocation7 + $0x130] sm:$0xff]
    %v139 = vld [vmem:[#allocation7 + $0x138] sm:$0xff]
    %v140 = vld [vmem:[#allocation7 + $0x140] sm:$0xff]
    %v141 = vld [vmem:[#allocation7 + $0x148] sm:$0xff]
    %v142 = vld [vmem:[#allocation7 + $0x150] sm:$0xff]
    %v143 = vld [vmem:[#allocation7 + $0x158] sm:$0xff]
    %v144 = vld [vmem:[#allocation7 + $0x160] sm:$0xff]
    %v145 = vld [vmem:[#allocation7 + $0x168] sm:$0xff]
    %v146 = vld [vmem:[#allocation7 + $0x170] sm:$0xff]
    %v147 = vld [vmem:[#allocation7 + $0x178] sm:$0xff]
    %v148 = vld [vmem:[%s4] sm:$0x7]
    %v149 = vld [vmem:[%s1] sm:$0x1]
    %s150 = sld [smem:[#allocation2]]
    %s151 = sshra.s32 %s150, 3
    %s152 = sand.u32 %s150, 7
    %s153 = sshra.s32 %s150, 3
    %s154 = sand.u32 %s150, 7
    %s155 = smul.u32 %s151, 3
    %s156 = smul.u32 %s155, 8
    %s157 = sadd.s32 %s156, %s154
    %s158 = scalar_lea.vmem [#allocation6], %s157
    %v159 = vld [vmem:[%s158] ss:$8 sm:$0x7]
    %160 = vmatprep.subr.mxu0 %v101
    %161 = vmatpush1.msra.mxu0 %v100
    %162 = vmatprep.subr.mxu0 %v104
    %163 = vmatpush1.msra.mxu0 %v103
    %164 = vmatprep.subr.mxu0 %v107
    %165 = vmatpush1.msra.mxu0 %v106
    %166 = vmatprep.subr.mxu0 %v110
    %167 = vmatpush1.msra.mxu0 %v109
    %168 = vmatprep.subr.mxu0 %v113
    %169 = vmatpush1.msra.mxu0 %v112
    %170 = vmatprep.subr.mxu0 %v116
    %171 = vmatpush1.msra.mxu0 %v115
    %172 = vmatprep.subr.mxu0 %v119
    %173 = vmatpush1.msra.mxu0 %v118
    %174 = vmatprep.subr.mxu0 %v122
    %175 = vmatpush1.msra.mxu0 %v121
    %176 = vmatprep.subr.mxu0 %v125
    %177 = vmatpush1.msra.mxu0 %v124
    %178 = vmatprep.subr.mxu0 %v128
    %179 = vmatpush1.msra.mxu0 %v127
    %180 = vmatprep.subr.mxu0 %v131
    %181 = vmatpush1.msra.mxu0 %v130
    %182 = vmatprep.subr.mxu0 %v134
    %183 = vmatpush1.msra.mxu0 %v133
    %184 = vmatprep.subr.mxu0 %v137
    %185 = vmatpush1.msra.mxu0 %v136
    %186 = vmatprep.subr.mxu0 %v140
    %187 = vmatpush1.msra.mxu0 %v139
    %188 = vmatprep.subr.mxu0 %v143
    %189 = vmatpush1.msra.mxu0 %v142
    %190 = vmatprep.subr.mxu0 %v146
    %191 = vmatpush1.msra.mxu0 %v145
    %192 = vmatprep.subr.mxu0 0.0
    %193 = vmatpush1.msra.mxu0 0.0
    %194 = vmatprep.subr.mxu0 0.0
    %195 = vmatpush1.msra.mxu0 0.0
    %196 = vmatprep.subr.mxu0 0.0
    %197 = vmatpush1.msra.mxu0 0.0
    %198 = vmatprep.subr.mxu0 0.0
    %199 = vmatpush1.msra.mxu0 0.0
    %200 = vmatprep.subr.mxu0 0.0
    %201 = vmatpush1.msra.mxu0 0.0
    %202 = vmatprep.subr.mxu0 0.0
    %203 = vmatpush1.msra.mxu0 0.0
    %204 = vmatprep.subr.mxu0 0.0
    %205 = vmatpush1.msra.mxu0 0.0
    %206 = vmatprep.subr.mxu0 0.0
    %207 = vmatpush1.msra.mxu0 0.0
    %208 = vmatprep.subr.mxu0 0.0
    %209 = vmatpush1.msra.mxu0 0.0
    %210 = vmatprep.subr.mxu0 0.0
    %211 = vmatpush1.msra.mxu0 0.0
    %212 = vmatprep.subr.mxu0 0.0
    %213 = vmatpush1.msra.mxu0 0.0
    %214 = vmatprep.subr.mxu0 0.0
    %215 = vmatpush1.msra.mxu0 0.0
    %216 = vmatprep.subr.mxu0 0.0
    %217 = vmatpush1.msra.mxu0 0.0
    %218 = vmatprep.subr.mxu0 0.0
    %219 = vmatpush1.msra.mxu0 0.0
    %220 = vmatprep.subr.mxu0 0.0
    %221 = vmatpush1.msra.mxu0 0.0
    %222 = vmatprep.subr.mxu0 0.0
    %223 = vmatpush1.msra.mxu0 0.0
    %224 = vmatprep.mubr.f32.mxu0 0.0
    %225 = vmatmul.mubr.f32.gmra.mrb[0].mxu0 %v149
    %v226 = vpop.f32.mrb[0].mxu0
    %v227 = vadd.f32 0.0, %v226
    %v228 = vpop.f32.mrb[0].mxu0
    %v229 = vadd.f32 0.0, %v228
    %230 = vdwg.mxu0
    %231 = vmatprep.subr.mxu0 0.0
    %232 = vmatpush1.msra.mxu0 %v102
    %233 = vmatprep.subr.mxu0 0.0
    %234 = vmatpush1.msra.mxu0 %v105
    %235 = vmatprep.subr.mxu0 0.0
    %236 = vmatpush1.msra.mxu0 %v108
    %237 = vmatprep.subr.mxu0 0.0
    %238 = vmatpush1.msra.mxu0 %v111
    %239 = vmatprep.subr.mxu0 0.0
    %240 = vmatpush1.msra.mxu0 %v114
    %241 = vmatprep.subr.mxu0 0.0
    %242 = vmatpush1.msra.mxu0 %v117
    %243 = vmatprep.subr.mxu0 0.0
    %244 = vmatpush1.msra.mxu0 %v120
    %245 = vmatprep.subr.mxu0 0.0
    %246 = vmatpush1.msra.mxu0 %v123
    %247 = vmatprep.subr.mxu0 0.0
    %248 = vmatpush1.msra.mxu0 %v126
    %249 = vmatprep.subr.mxu0 0.0
    %250 = vmatpush1.msra.mxu0 %v129
    %251 = vmatprep.subr.mxu0 0.0
    %252 = vmatpush1.msra.mxu0 %v132
    %253 = vmatprep.subr.mxu0 0.0
    %254 = vmatpush1.msra.mxu0 %v135
    %255 = vmatprep.subr.mxu0 0.0
    %256 = vmatpush1.msra.mxu0 %v138
    %257 = vmatprep.subr.mxu0 0.0
    %258 = vmatpush1.msra.mxu0 %v141
    %259 = vmatprep.subr.mxu0 0.0
    %260 = vmatpush1.msra.mxu0 %v144
    %261 = vmatprep.subr.mxu0 0.0
    %262 = vmatpush1.msra.mxu0 %v147
    %263 = vmatprep.subr.mxu0 0.0
    %264 = vmatpush1.msra.mxu0 0.0
    %265 = vmatprep.subr.mxu0 0.0
    %266 = vmatpush1.msra.mxu0 0.0
    %267 = vmatprep.subr.mxu0 0.0
    %268 = vmatpush1.msra.mxu0 0.0
    %269 = vmatprep.subr.mxu0 0.0
    %270 = vmatpush1.msra.mxu0 0.0
    %271 = vmatprep.subr.mxu0 0.0
    %272 = vmatpush1.msra.mxu0 0.0
    %273 = vmatprep.subr.mxu0 0.0
    %274 = vmatpush1.msra.mxu0 0.0
    %275 = vmatprep.subr.mxu0 0.0
    %276 = vmatpush1.msra.mxu0 0.0
    %277 = vmatprep.subr.mxu0 0.0
    %278 = vmatpush1.msra.mxu0 0.0
    %279 = vmatprep.subr.mxu0 0.0
    %280 = vmatpush1.msra.mxu0 0.0
    %281 = vmatprep.subr.mxu0 0.0
    %282 = vmatpush1.msra.mxu0 0.0
    %283 = vmatprep.subr.mxu0 0.0
    %284 = vmatpush1.msra.mxu0 0.0
    %285 = vmatprep.subr.mxu0 0.0
    %286 = vmatpush1.msra.mxu0 0.0
    %287 = vmatprep.subr.mxu0 0.0
    %288 = vmatpush1.msra.mxu0 0.0
    %289 = vmatprep.subr.mxu0 0.0
    %290 = vmatpush1.msra.mxu0 0.0
    %291 = vmatprep.subr.mxu0 0.0
    %292 = vmatpush1.msra.mxu0 0.0
    %293 = vmatprep.subr.mxu0 0.0
    %294 = vmatpush1.msra.mxu0 0.0
    %295 = vmatprep.mubr.f32.mxu0 0.0
    %296 = vmatmul.mubr.f32.gmra.mrb[0].mxu0 %v149
    %v297 = vpop.f32.mrb[0].mxu0
    %v298 = vadd.f32 0.0, %v297
    %v299 = vpop.f32.mrb[0].mxu0
    %300 = vdwg.mxu0
    %v304 = vcombine.low %v227, %v229
    %v306 = vunpack.c.l.s4 1966171168
    %v307 = vunpack.c.0.s8 %v306
    %v308 = vlaneseq
    %v309 = vshrl.u32 %v308, 7
    %v310 = vsub.s32 %v307, %v309
    %v311 = vrot.slane %v304, %v310
    %v313 = vunpack.c.l.s4 1966171168
    %v314 = vunpack.c.0.s8 %v313
    %v315 = vlaneseq
    %v316 = vshrl.u32 %v315, 7
    %v317 = vsub.s32 %v314, %v316
    %v318 = vrot.slane %v298, %v317
    %v319 = vcombine.low %v311, %v318
    %v321 = vunpack.c.l.s4 1966171168
    %v322 = vunpack.c.0.s8 %v321
    %v323 = vlaneseq
    %v324 = vshrl.u32 %v323, 7
    %v325 = vsub.s32 %v322, %v324
    %v326 = vrot.slane %v319, %v325
    %v328 = vadd.f32 %v159, %v326
    %v329 = vadd.f32 %v328, %v148
    %v330 = vxor.u32 %v329, 2147483648
    %v331 = vmul.f32 %v330, 1.442695
    %v332 = vpow.pop %v331
    %v333 = vadd.f32 %v332, 1.0
    %v334 = vrcp.pop %v333
    %v335 = vmul.f32 1.0, %v334
    %v337 = vrot.slane %v329, 1
    %v339 = vtanh.pop %v337
    %v340 = vrot.slane %v329, 2
    %v342 = vxor.u32 %v340, 2147483648
    %v343 = vmul.f32 %v342, 1.442695
    %v344 = vpow.pop %v343
    %v345 = vadd.f32 %v344, 1.0
    %v346 = vrcp.pop %v345
    %v347 = vmul.f32 1.0, %v346
    %v348 = vmul.f32 %v335, %v339
    %v349 = vtanh.pop %v348
    %v350 = vmul.f32 %v347, %v349
    %s351 = sld [smem:[#allocation2 + $0x1]]
    %s352 = sshra.s32 %s351, 3
    %s353 = sand.u32 %s351, 7
    %s354 = sshra.s32 %s351, 3
    %s355 = sand.u32 %s351, 7
    %s356 = smul.u32 %s352, 3
    %s357 = smul.u32 %s356, 8
    %s358 = sadd.s32 %s357, %s355
    %s359 = scalar_lea.vmem [#allocation6], %s358
    %v360 = vld [vmem:[%s359] ss:$8 sm:$0x7]
    %361 = vmatprep.subr.mxu0 %v101
    %362 = vmatpush1.msra.mxu0 %v100
    %363 = vmatprep.subr.mxu0 %v104
    %364 = vmatpush1.msra.mxu0 %v103
    %365 = vmatprep.subr.mxu0 %v107
    %366 = vmatpush1.msra.mxu0 %v106
    %367 = vmatprep.subr.mxu0 %v110
    %368 = vmatpush1.msra.mxu0 %v109
    %369 = vmatprep.subr.mxu0 %v113
    %370 = vmatpush1.msra.mxu0 %v112
    %371 = vmatprep.subr.mxu0 %v116
    %372 = vmatpush1.msra.mxu0 %v115
    %373 = vmatprep.subr.mxu0 %v119
    %374 = vmatpush1.msra.mxu0 %v118
    %375 = vmatprep.subr.mxu0 %v122
    %376 = vmatpush1.msra.mxu0 %v121
    %377 = vmatprep.subr.mxu0 %v125
    %378 = vmatpush1.msra.mxu0 %v124
    %379 = vmatprep.subr.mxu0 %v128
    %380 = vmatpush1.msra.mxu0 %v127
    %381 = vmatprep.subr.mxu0 %v131
    %382 = vmatpush1.msra.mxu0 %v130
    %383 = vmatprep.subr.mxu0 %v134
    %384 = vmatpush1.msra.mxu0 %v133
    %385 = vmatprep.subr.mxu0 %v137
    %386 = vmatpush1.msra.mxu0 %v136
    %387 = vmatprep.subr.mxu0 %v140
    %388 = vmatpush1.msra.mxu0 %v139
    %389 = vmatprep.subr.mxu0 %v143
    %390 = vmatpush1.msra.mxu0 %v142
    %391 = vmatprep.subr.mxu0 %v146
    %392 = vmatpush1.msra.mxu0 %v145
    %393 = vmatprep.subr.mxu0 0.0
    %394 = vmatpush1.msra.mxu0 0.0
    %395 = vmatprep.subr.mxu0 0.0
    %396 = vmatpush1.msra.mxu0 0.0
    %397 = vmatprep.subr.mxu0 0.0
    %398 = vmatpush1.msra.mxu0 0.0
    %399 = vmatprep.subr.mxu0 0.0
    %400 = vmatpush1.msra.mxu0 0.0
    %401 = vmatprep.subr.mxu0 0.0
    %402 = vmatpush1.msra.mxu0 0.0
    %403 = vmatprep.subr.mxu0 0.0
    %404 = vmatpush1.msra.mxu0 0.0
    %405 = vmatprep.subr.mxu0 0.0
    %406 = vmatpush1.msra.mxu0 0.0
    %407 = vmatprep.subr.mxu0 0.0
    %408 = vmatpush1.msra.mxu0 0.0
    %409 = vmatprep.subr.mxu0 0.0
    %410 = vmatpush1.msra.mxu0 0.0
    %411 = vmatprep.subr.mxu0 0.0
    %412 = vmatpush1.msra.mxu0 0.0
    %413 = vmatprep.subr.mxu0 0.0
    %414 = vmatpush1.msra.mxu0 0.0
    %415 = vmatprep.subr.mxu0 0.0
    %416 = vmatpush1.msra.mxu0 0.0
    %417 = vmatprep.subr.mxu0 0.0
    %418 = vmatpush1.msra.mxu0 0.0
    %419 = vmatprep.subr.mxu0 0.0
    %420 = vmatpush1.msra.mxu0 0.0
    %421 = vmatprep.subr.mxu0 0.0
    %422 = vmatpush1.msra.mxu0 0.0
    %423 = vmatprep.subr.mxu0 0.0
    %424 = vmatpush1.msra.mxu0 0.0
    %425 = vmatprep.mubr.f32.mxu0 0.0
    %426 = vmatmul.mubr.f32.gmra.mrb[0].mxu0 %v350
    %v427 = vpop.f32.mrb[0].mxu0
    %v428 = vadd.f32 0.0, %v427
    %v429 = vpop.f32.mrb[0].mxu0
    %v430 = vadd.f32 0.0, %v429
    %431 = vdwg.mxu0
    %432 = vmatprep.subr.mxu0 0.0
    %433 = vmatpush1.msra.mxu0 %v102
    %434 = vmatprep.subr.mxu0 0.0
    %435 = vmatpush1.msra.mxu0 %v105
    %436 = vmatprep.subr.mxu0 0.0
    %437 = vmatpush1.msra.mxu0 %v108
    %438 = vmatprep.subr.mxu0 0.0
    %439 = vmatpush1.msra.mxu0 %v111
    %440 = vmatprep.subr.mxu0 0.0
    %441 = vmatpush1.msra.mxu0 %v114
    %442 = vmatprep.subr.mxu0 0.0
    %443 = vmatpush1.msra.mxu0 %v117
    %444 = vmatprep.subr.mxu0 0.0
    %445 = vmatpush1.msra.mxu0 %v120
    %446 = vmatprep.subr.mxu0 0.0
    %447 = vmatpush1.msra.mxu0 %v123
    %448 = vmatprep.subr.mxu0 0.0
    %449 = vmatpush1.msra.mxu0 %v126
    %450 = vmatprep.subr.mxu0 0.0
    %451 = vmatpush1.msra.mxu0 %v129
    %452 = vmatprep.subr.mxu0 0.0
    %453 = vmatpush1.msra.mxu0 %v132
    %454 = vmatprep.subr.mxu0 0.0
    %455 = vmatpush1.msra.mxu0 %v135
    %456 = vmatprep.subr.mxu0 0.0
    %457 = vmatpush1.msra.mxu0 %v138
    %458 = vmatprep.subr.mxu0 0.0
    %459 = vmatpush1.msra.mxu0 %v141
    %460 = vmatprep.subr.mxu0 0.0
    %461 = vmatpush1.msra.mxu0 %v144
    %462 = vmatprep.subr.mxu0 0.0
    %463 = vmatpush1.msra.mxu0 %v147
    %464 = vmatprep.subr.mxu0 0.0
    %465 = vmatpush1.msra.mxu0 0.0
    %466 = vmatprep.subr.mxu0 0.0
    %467 = vmatpush1.msra.mxu0 0.0
    %468 = vmatprep.subr.mxu0 0.0
    %469 = vmatpush1.msra.mxu0 0.0
    %470 = vmatprep.subr.mxu0 0.0
    %471 = vmatpush1.msra.mxu0 0.0
    %472 = vmatprep.subr.mxu0 0.0
    %473 = vmatpush1.msra.mxu0 0.0
    %474 = vmatprep.subr.mxu0 0.0
    %475 = vmatpush1.msra.mxu0 0.0
    %476 = vmatprep.subr.mxu0 0.0
    %477 = vmatpush1.msra.mxu0 0.0
    %478 = vmatprep.subr.mxu0 0.0
    %479 = vmatpush1.msra.mxu0 0.0
    %480 = vmatprep.subr.mxu0 0.0
    %481 = vmatpush1.msra.mxu0 0.0
    %482 = vmatprep.subr.mxu0 0.0
    %483 = vmatpush1.msra.mxu0 0.0
    %484 = vmatprep.subr.mxu0 0.0
    %485 = vmatpush1.msra.mxu0 0.0
    %486 = vmatprep.subr.mxu0 0.0
    %487 = vmatpush1.msra.mxu0 0.0
    %488 = vmatprep.subr.mxu0 0.0
    %489 = vmatpush1.msra.mxu0 0.0
    %490 = vmatprep.subr.mxu0 0.0
    %491 = vmatpush1.msra.mxu0 0.0
    %492 = vmatprep.subr.mxu0 0.0
    %493 = vmatpush1.msra.mxu0 0.0
    %494 = vmatprep.subr.mxu0 0.0
    %495 = vmatpush1.msra.mxu0 0.0
    %496 = vmatprep.mubr.f32.mxu0 0.0
    %497 = vmatmul.mubr.f32.gmra.mrb[0].mxu0 %v350
    %v498 = vpop.f32.mrb[0].mxu0
    %v499 = vadd.f32 0.0, %v498
    %v500 = vpop.f32.mrb[0].mxu0
    %501 = vdwg.mxu0
    %v505 = vcombine.low %v428, %v430
    %v507 = vunpack.c.l.s4 1966171168
    %v508 = vunpack.c.0.s8 %v507
    %v509 = vlaneseq
    %v510 = vshrl.u32 %v509, 7
    %v511 = vsub.s32 %v508, %v510
    %v512 = vrot.slane %v505, %v511
    %v514 = vunpack.c.l.s4 1966171168
    %v515 = vunpack.c.0.s8 %v514
    %v516 = vlaneseq
    %v517 = vshrl.u32 %v516, 7
    %v518 = vsub.s32 %v515, %v517
    %v519 = vrot.slane %v499, %v518
    %v520 = vcombine.low %v512, %v519
    %v522 = vunpack.c.l.s4 1966171168
    %v523 = vunpack.c.0.s8 %v522
    %v524 = vlaneseq
    %v525 = vshrl.u32 %v524, 7
    %v526 = vsub.s32 %v523, %v525
    %v527 = vrot.slane %v520, %v526
    %v529 = vadd.f32 %v360, %v527
    %v530 = vadd.f32 %v529, %v148
    %v531 = vxor.u32 %v530, 2147483648
    %v532 = vmul.f32 %v531, 1.442695
    %v533 = vpow.pop %v532
    %v534 = vadd.f32 %v533, 1.0
    %v535 = vrcp.pop %v534
    %v536 = vmul.f32 1.0, %v535
    %v538 = vrot.slane %v530, 1
    %v540 = vtanh.pop %v538
    %v541 = vrot.slane %v530, 2
    %v543 = vxor.u32 %v541, 2147483648
    %v544 = vmul.f32 %v543, 1.442695
    %v545 = vpow.pop %v544
    %v546 = vadd.f32 %v545, 1.0
    %v547 = vrcp.pop %v546
    %v548 = vmul.f32 1.0, %v547
    %v549 = vmul.f32 %v536, %v540
    %v550 = vtanh.pop %v549
    %v551 = vmul.f32 %v548, %v550
    %s552 = sld [smem:[#allocation2 + $0x2]]
    %s553 = sshra.s32 %s552, 3
    %s554 = sand.u32 %s552, 7
    %s555 = sshra.s32 %s552, 3
    %s556 = sand.u32 %s552, 7
    %s557 = smul.u32 %s553, 3
    %s558 = smul.u32 %s557, 8
    %s559 = sadd.s32 %s558, %s556
    %s560 = scalar_lea.vmem [#allocation6], %s559
    %v561 = vld [vmem:[%s560] ss:$8 sm:$0x7]
    %562 = vmatprep.subr.mxu0 %v101
    %563 = vmatpush1.msra.mxu0 %v100
    %564 = vmatprep.subr.mxu0 %v104
    %565 = vmatpush1.msra.mxu0 %v103
    %566 = vmatprep.subr.mxu0 %v107
    %567 = vmatpush1.msra.mxu0 %v106
    %568 = vmatprep.subr.mxu0 %v110
    %569 = vmatpush1.msra.mxu0 %v109
    %570 = vmatprep.subr.mxu0 %v113
    %571 = vmatpush1.msra.mxu0 %v112
    %572 = vmatprep.subr.mxu0 %v116
    %573 = vmatpush1.msra.mxu0 %v115
    %574 = vmatprep.subr.mxu0 %v119
    %575 = vmatpush1.msra.mxu0 %v118
    %576 = vmatprep.subr.mxu0 %v122
    %577 = vmatpush1.msra.mxu0 %v121
    %578 = vmatprep.subr.mxu0 %v125
    %579 = vmatpush1.msra.mxu0 %v124
    %580 = vmatprep.subr.mxu0 %v128
    %581 = vmatpush1.msra.mxu0 %v127
    %582 = vmatprep.subr.mxu0 %v131
    %583 = vmatpush1.msra.mxu0 %v130
    %584 = vmatprep.subr.mxu0 %v134
    %585 = vmatpush1.msra.mxu0 %v133
    %586 = vmatprep.subr.mxu0 %v137
    %587 = vmatpush1.msra.mxu0 %v136
    %588 = vmatprep.subr.mxu0 %v140
    %589 = vmatpush1.msra.mxu0 %v139
    %590 = vmatprep.subr.mxu0 %v143
    %591 = vmatpush1.msra.mxu0 %v142
    %592 = vmatprep.subr.mxu0 %v146
    %593 = vmatpush1.msra.mxu0 %v145
    %594 = vmatprep.subr.mxu0 0.0
    %595 = vmatpush1.msra.mxu0 0.0
    %596 = vmatprep.subr.mxu0 0.0
    %597 = vmatpush1.msra.mxu0 0.0
    %598 = vmatprep.subr.mxu0 0.0
    %599 = vmatpush1.msra.mxu0 0.0
    %600 = vmatprep.subr.mxu0 0.0
    %601 = vmatpush1.msra.mxu0 0.0
    %602 = vmatprep.subr.mxu0 0.0
    %603 = vmatpush1.msra.mxu0 0.0
    %604 = vmatprep.subr.mxu0 0.0
    %605 = vmatpush1.msra.mxu0 0.0
    %606 = vmatprep.subr.mxu0 0.0
    %607 = vmatpush1.msra.mxu0 0.0
    %608 = vmatprep.subr.mxu0 0.0
    %609 = vmatpush1.msra.mxu0 0.0
    %610 = vmatprep.subr.mxu0 0.0
    %611 = vmatpush1.msra.mxu0 0.0
    %612 = vmatprep.subr.mxu0 0.0
    %613 = vmatpush1.msra.mxu0 0.0
    %614 = vmatprep.subr.mxu0 0.0
    %615 = vmatpush1.msra.mxu0 0.0
    %616 = vmatprep.subr.mxu0 0.0
    %617 = vmatpush1.msra.mxu0 0.0
    %618 = vmatprep.subr.mxu0 0.0
    %619 = vmatpush1.msra.mxu0 0.0
    %620 = vmatprep.subr.mxu0 0.0
    %621 = vmatpush1.msra.mxu0 0.0
    %622 = vmatprep.subr.mxu0 0.0
    %623 = vmatpush1.msra.mxu0 0.0
    %624 = vmatprep.subr.mxu0 0.0
    %625 = vmatpush1.msra.mxu0 0.0
    %626 = vmatprep.mubr.f32.mxu0 0.0
    %627 = vmatmul.mubr.f32.gmra.mrb[0].mxu0 %v551
    %v628 = vpop.f32.mrb[0].mxu0
    %v629 = vadd.f32 0.0, %v628
    %v630 = vpop.f32.mrb[0].mxu0
    %v631 = vadd.f32 0.0, %v630
    %632 = vdwg.mxu0
    %633 = vmatprep.subr.mxu0 0.0
    %634 = vmatpush1.msra.mxu0 %v102
    %635 = vmatprep.subr.mxu0 0.0
    %636 = vmatpush1.msra.mxu0 %v105
    %637 = vmatprep.subr.mxu0 0.0
    %638 = vmatpush1.msra.mxu0 %v108
    %639 = vmatprep.subr.mxu0 0.0
    %640 = vmatpush1.msra.mxu0 %v111
    %641 = vmatprep.subr.mxu0 0.0
    %642 = vmatpush1.msra.mxu0 %v114
    %643 = vmatprep.subr.mxu0 0.0
    %644 = vmatpush1.msra.mxu0 %v117
    %645 = vmatprep.subr.mxu0 0.0
    %646 = vmatpush1.msra.mxu0 %v120
    %647 = vmatprep.subr.mxu0 0.0
    %648 = vmatpush1.msra.mxu0 %v123
    %649 = vmatprep.subr.mxu0 0.0
    %650 = vmatpush1.msra.mxu0 %v126
    %651 = vmatprep.subr.mxu0 0.0
    %652 = vmatpush1.msra.mxu0 %v129
    %653 = vmatprep.subr.mxu0 0.0
    %654 = vmatpush1.msra.mxu0 %v132
    %655 = vmatprep.subr.mxu0 0.0
    %656 = vmatpush1.msra.mxu0 %v135
    %657 = vmatprep.subr.mxu0 0.0
    %658 = vmatpush1.msra.mxu0 %v138
    %659 = vmatprep.subr.mxu0 0.0
    %660 = vmatpush1.msra.mxu0 %v141
    %661 = vmatprep.subr.mxu0 0.0
    %662 = vmatpush1.msra.mxu0 %v144
    %663 = vmatprep.subr.mxu0 0.0
    %664 = vmatpush1.msra.mxu0 %v147
    %665 = vmatprep.subr.mxu0 0.0
    %666 = vmatpush1.msra.mxu0 0.0
    %667 = vmatprep.subr.mxu0 0.0
    %668 = vmatpush1.msra.mxu0 0.0
    %669 = vmatprep.subr.mxu0 0.0
    %670 = vmatpush1.msra.mxu0 0.0
    %671 = vmatprep.subr.mxu0 0.0
    %672 = vmatpush1.msra.mxu0 0.0
    %673 = vmatprep.subr.mxu0 0.0
    %674 = vmatpush1.msra.mxu0 0.0
    %675 = vmatprep.subr.mxu0 0.0
    %676 = vmatpush1.msra.mxu0 0.0
    %677 = vmatprep.subr.mxu0 0.0
    %678 = vmatpush1.msra.mxu0 0.0
    %679 = vmatprep.subr.mxu0 0.0
    %680 = vmatpush1.msra.mxu0 0.0
    %681 = vmatprep.subr.mxu0 0.0
    %682 = vmatpush1.msra.mxu0 0.0
    %683 = vmatprep.subr.mxu0 0.0
    %684 = vmatpush1.msra.mxu0 0.0
    %685 = vmatprep.subr.mxu0 0.0
    %686 = vmatpush1.msra.mxu0 0.0
    %687 = vmatprep.subr.mxu0 0.0
    %688 = vmatpush1.msra.mxu0 0.0
    %689 = vmatprep.subr.mxu0 0.0
    %690 = vmatpush1.msra.mxu0 0.0
    %691 = vmatprep.subr.mxu0 0.0
    %692 = vmatpush1.msra.mxu0 0.0
    %693 = vmatprep.subr.mxu0 0.0
    %694 = vmatpush1.msra.mxu0 0.0
    %695 = vmatprep.subr.mxu0 0.0
    %696 = vmatpush1.msra.mxu0 0.0
    %697 = vmatprep.mubr.f32.mxu0 0.0
    %698 = vmatmul.mubr.f32.gmra.mrb[0].mxu0 %v551
    %v699 = vpop.f32.mrb[0].mxu0
    %v700 = vadd.f32 0.0, %v699
    %v701 = vpop.f32.mrb[0].mxu0
    %702 = vdwg.mxu0
    %v706 = vcombine.low %v629, %v631
    %v708 = vunpack.c.l.s4 1966171168
    %v709 = vunpack.c.0.s8 %v708
    %v710 = vlaneseq
    %v711 = vshrl.u32 %v710, 7
    %v712 = vsub.s32 %v709, %v711
    %v713 = vrot.slane %v706, %v712
    %v715 = vunpack.c.l.s4 1966171168
    %v716 = vunpack.c.0.s8 %v715
    %v717 = vlaneseq
    %v718 = vshrl.u32 %v717, 7
    %v719 = vsub.s32 %v716, %v718
    %v720 = vrot.slane %v700, %v719
    %v721 = vcombine.low %v713, %v720
    %v723 = vunpack.c.l.s4 1966171168
    %v724 = vunpack.c.0.s8 %v723
    %v725 = vlaneseq
    %v726 = vshrl.u32 %v725, 7
    %v727 = vsub.s32 %v724, %v726
    %v728 = vrot.slane %v721, %v727
    %v730 = vadd.f32 %v561, %v728
    %v731 = vadd.f32 %v730, %v148
    %v732 = vxor.u32 %v731, 2147483648
    %v733 = vmul.f32 %v732, 1.442695
    %v734 = vpow.pop %v733
    %v735 = vadd.f32 %v734, 1.0
    %v736 = vrcp.pop %v735
    %v737 = vmul.f32 1.0, %v736
    %v739 = vrot.slane %v731, 1
    %v741 = vtanh.pop %v739
    %v742 = vrot.slane %v731, 2
    %v744 = vxor.u32 %v742, 2147483648
    %v745 = vmul.f32 %v744, 1.442695
    %v746 = vpow.pop %v745
    %v747 = vadd.f32 %v746, 1.0
    %v748 = vrcp.pop %v747
    %v749 = vmul.f32 1.0, %v748
    %v750 = vmul.f32 %v737, %v741
    %v751 = vtanh.pop %v750
    %v752 = vmul.f32 %v749, %v751
    %s753 = sld [smem:[#allocation2 + $0x3]]
    %s754 = sshra.s32 %s753, 3
    %s755 = sand.u32 %s753, 7
    %s756 = sshra.s32 %s753, 3
    %s757 = sand.u32 %s753, 7
    %s758 = smul.u32 %s754, 3
    %s759 = smul.u32 %s758, 8
    %s760 = sadd.s32 %s759, %s757
    %s761 = scalar_lea.vmem [#allocation6], %s760
    %v762 = vld [vmem:[%s761] ss:$8 sm:$0x7]
    %763 = vmatprep.subr.mxu0 %v101
    %764 = vmatpush1.msra.mxu0 %v100
    %765 = vmatprep.subr.mxu0 %v104
    %766 = vmatpush1.msra.mxu0 %v103
    %767 = vmatprep.subr.mxu0 %v107
    %768 = vmatpush1.msra.mxu0 %v106
    %769 = vmatprep.subr.mxu0 %v110
    %770 = vmatpush1.msra.mxu0 %v109
    %771 = vmatprep.subr.mxu0 %v113
    %772 = vmatpush1.msra.mxu0 %v112
    %773 = vmatprep.subr.mxu0 %v116
    %774 = vmatpush1.msra.mxu0 %v115
    %775 = vmatprep.subr.mxu0 %v119
    %776 = vmatpush1.msra.mxu0 %v118
    %777 = vmatprep.subr.mxu0 %v122
    %778 = vmatpush1.msra.mxu0 %v121
    %779 = vmatprep.subr.mxu0 %v125
    %780 = vmatpush1.msra.mxu0 %v124
    %781 = vmatprep.subr.mxu0 %v128
    %782 = vmatpush1.msra.mxu0 %v127
    %783 = vmatprep.subr.mxu0 %v131
    %784 = vmatpush1.msra.mxu0 %v130
    %785 = vmatprep.subr.mxu0 %v134
    %786 = vmatpush1.msra.mxu0 %v133
    %787 = vmatprep.subr.mxu0 %v137
    %788 = vmatpush1.msra.mxu0 %v136
    %789 = vmatprep.subr.mxu0 %v140
    %790 = vmatpush1.msra.mxu0 %v139
    %791 = vmatprep.subr.mxu0 %v143
    %792 = vmatpush1.msra.mxu0 %v142
    %793 = vmatprep.subr.mxu0 %v146
    %794 = vmatpush1.msra.mxu0 %v145
    %795 = vmatprep.subr.mxu0 0.0
    %796 = vmatpush1.msra.mxu0 0.0
    %797 = vmatprep.subr.mxu0 0.0
    %798 = vmatpush1.msra.mxu0 0.0
    %799 = vmatprep.subr.mxu0 0.0
    %800 = vmatpush1.msra.mxu0 0.0
    %801 = vmatprep.subr.mxu0 0.0
    %802 = vmatpush1.msra.mxu0 0.0
    %803 = vmatprep.subr.mxu0 0.0
    %804 = vmatpush1.msra.mxu0 0.0
    %805 = vmatprep.subr.mxu0 0.0
    %806 = vmatpush1.msra.mxu0 0.0
    %807 = vmatprep.subr.mxu0 0.0
    %808 = vmatpush1.msra.mxu0 0.0
    %809 = vmatprep.subr.mxu0 0.0
    %810 = vmatpush1.msra.mxu0 0.0
    %811 = vmatprep.subr.mxu0 0.0
    %812 = vmatpush1.msra.mxu0 0.0
    %813 = vmatprep.subr.mxu0 0.0
    %814 = vmatpush1.msra.mxu0 0.0
    %815 = vmatprep.subr.mxu0 0.0
    %816 = vmatpush1.msra.mxu0 0.0
    %817 = vmatprep.subr.mxu0 0.0
    %818 = vmatpush1.msra.mxu0 0.0
    %819 = vmatprep.subr.mxu0 0.0
    %820 = vmatpush1.msra.mxu0 0.0
    %821 = vmatprep.subr.mxu0 0.0
    %822 = vmatpush1.msra.mxu0 0.0
    %823 = vmatprep.subr.mxu0 0.0
    %824 = vmatpush1.msra.mxu0 0.0
    %825 = vmatprep.subr.mxu0 0.0
    %826 = vmatpush1.msra.mxu0 0.0
    %827 = vmatprep.mubr.f32.mxu0 0.0
    %828 = vmatmul.mubr.f32.gmra.mrb[0].mxu0 %v752
    %v829 = vpop.f32.mrb[0].mxu0
    %v830 = vadd.f32 0.0, %v829
    %v831 = vpop.f32.mrb[0].mxu0
    %v832 = vadd.f32 0.0, %v831
    %833 = vdwg.mxu0
    %834 = vmatprep.subr.mxu0 0.0
    %835 = vmatpush1.msra.mxu0 %v102
    %836 = vmatprep.subr.mxu0 0.0
    %837 = vmatpush1.msra.mxu0 %v105
    %838 = vmatprep.subr.mxu0 0.0
    %839 = vmatpush1.msra.mxu0 %v108
    %840 = vmatprep.subr.mxu0 0.0
    %841 = vmatpush1.msra.mxu0 %v111
    %842 = vmatprep.subr.mxu0 0.0
    %843 = vmatpush1.msra.mxu0 %v114
    %844 = vmatprep.subr.mxu0 0.0
    %845 = vmatpush1.msra.mxu0 %v117
    %846 = vmatprep.subr.mxu0 0.0
    %847 = vmatpush1.msra.mxu0 %v120
    %848 = vmatprep.subr.mxu0 0.0
    %849 = vmatpush1.msra.mxu0 %v123
    %850 = vmatprep.subr.mxu0 0.0
    %851 = vmatpush1.msra.mxu0 %v126
    %852 = vmatprep.subr.mxu0 0.0
    %853 = vmatpush1.msra.mxu0 %v129
    %854 = vmatprep.subr.mxu0 0.0
    %855 = vmatpush1.msra.mxu0 %v132
    %856 = vmatprep.subr.mxu0 0.0
    %857 = vmatpush1.msra.mxu0 %v135
    %858 = vmatprep.subr.mxu0 0.0
    %859 = vmatpush1.msra.mxu0 %v138
    %860 = vmatprep.subr.mxu0 0.0
    %861 = vmatpush1.msra.mxu0 %v141
    %862 = vmatprep.subr.mxu0 0.0
    %863 = vmatpush1.msra.mxu0 %v144
    %864 = vmatprep.subr.mxu0 0.0
    %865 = vmatpush1.msra.mxu0 %v147
    %866 = vmatprep.subr.mxu0 0.0
    %867 = vmatpush1.msra.mxu0 0.0
    %868 = vmatprep.subr.mxu0 0.0
    %869 = vmatpush1.msra.mxu0 0.0
    %870 = vmatprep.subr.mxu0 0.0
    %871 = vmatpush1.msra.mxu0 0.0
    %872 = vmatprep.subr.mxu0 0.0
    %873 = vmatpush1.msra.mxu0 0.0
    %874 = vmatprep.subr.mxu0 0.0
    %875 = vmatpush1.msra.mxu0 0.0
    %876 = vmatprep.subr.mxu0 0.0
    %877 = vmatpush1.msra.mxu0 0.0
    %878 = vmatprep.subr.mxu0 0.0
    %879 = vmatpush1.msra.mxu0 0.0
    %880 = vmatprep.subr.mxu0 0.0
    %881 = vmatpush1.msra.mxu0 0.0
    %882 = vmatprep.subr.mxu0 0.0
    %883 = vmatpush1.msra.mxu0 0.0
    %884 = vmatprep.subr.mxu0 0.0
    %885 = vmatpush1.msra.mxu0 0.0
    %886 = vmatprep.subr.mxu0 0.0
    %887 = vmatpush1.msra.mxu0 0.0
    %888 = vmatprep.subr.mxu0 0.0
    %889 = vmatpush1.msra.mxu0 0.0
    %890 = vmatprep.subr.mxu0 0.0
    %891 = vmatpush1.msra.mxu0 0.0
    %892 = vmatprep.subr.mxu0 0.0
    %893 = vmatpush1.msra.mxu0 0.0
    %894 = vmatprep.subr.mxu0 0.0
    %895 = vmatpush1.msra.mxu0 0.0
    %896 = vmatprep.subr.mxu0 0.0
    %897 = vmatpush1.msra.mxu0 0.0
    %898 = vmatprep.mubr.f32.mxu0 0.0
    %899 = vmatmul.mubr.f32.gmra.mrb[0].mxu0 %v752
    %v900 = vpop.f32.mrb[0].mxu0
    %v901 = vadd.f32 0.0, %v900
    %v902 = vpop.f32.mrb[0].mxu0
    %903 = vdwg.mxu0
    %v907 = vcombine.low %v830, %v832
    %v909 = vunpack.c.l.s4 1966171168
    %v910 = vunpack.c.0.s8 %v909
    %v911 = vlaneseq
    %v912 = vshrl.u32 %v911, 7
    %v913 = vsub.s32 %v910, %v912
    %v914 = vrot.slane %v907, %v913
    %v916 = vunpack.c.l.s4 1966171168
    %v917 = vunpack.c.0.s8 %v916
    %v918 = vlaneseq
    %v919 = vshrl.u32 %v918, 7
    %v920 = vsub.s32 %v917, %v919
    %v921 = vrot.slane %v901, %v920
    %v922 = vcombine.low %v914, %v921
    %v924 = vunpack.c.l.s4 1966171168
    %v925 = vunpack.c.0.s8 %v924
    %v926 = vlaneseq
    %v927 = vshrl.u32 %v926, 7
    %v928 = vsub.s32 %v925, %v927
    %v929 = vrot.slane %v922, %v928
    %v931 = vadd.f32 %v762, %v929
    %v932 = vadd.f32 %v931, %v148
    %v933 = vxor.u32 %v932, 2147483648
    %v934 = vmul.f32 %v933, 1.442695
    %v935 = vpow.pop %v934
    %v936 = vadd.f32 %v935, 1.0
    %v937 = vrcp.pop %v936
    %v938 = vmul.f32 1.0, %v937
    %v940 = vrot.slane %v932, 1
    %v942 = vtanh.pop %v940
    %v943 = vrot.slane %v932, 2
    %v945 = vxor.u32 %v943, 2147483648
    %v946 = vmul.f32 %v945, 1.442695
    %v947 = vpow.pop %v946
    %v948 = vadd.f32 %v947, 1.0
    %v949 = vrcp.pop %v948
    %v950 = vmul.f32 1.0, %v949
    %v951 = vmul.f32 %v938, %v942
    %v952 = vtanh.pop %v951
    %v953 = vmul.f32 %v950, %v952
    %s954 = sld [smem:[#allocation2 + $0x4]]
    %s955 = sshra.s32 %s954, 3
    %s956 = sand.u32 %s954, 7
    %s957 = sshra.s32 %s954, 3
    %s958 = sand.u32 %s954, 7
    %s959 = smul.u32 %s955, 3
    %s960 = smul.u32 %s959, 8
    %s961 = sadd.s32 %s960, %s958
    %s962 = scalar_lea.vmem [#allocation6], %s961
    %v963 = vld [vmem:[%s962] ss:$8 sm:$0x7]
    %964 = vmatprep.subr.mxu0 %v101
    %965 = vmatpush1.msra.mxu0 %v100
    %966 = vmatprep.subr.mxu0 %v104
    %967 = vmatpush1.msra.mxu0 %v103
    %968 = vmatprep.subr.mxu0 %v107
    %969 = vmatpush1.msra.mxu0 %v106
    %970 = vmatprep.subr.mxu0 %v110
    %971 = vmatpush1.msra.mxu0 %v109
    %972 = vmatprep.subr.mxu0 %v113
    %973 = vmatpush1.msra.mxu0 %v112
    %974 = vmatprep.subr.mxu0 %v116
    %975 = vmatpush1.msra.mxu0 %v115
    %976 = vmatprep.subr.mxu0 %v119
    %977 = vmatpush1.msra.mxu0 %v118
    %978 = vmatprep.subr.mxu0 %v122
    %979 = vmatpush1.msra.mxu0 %v121
    %980 = vmatprep.subr.mxu0 %v125
    %981 = vmatpush1.msra.mxu0 %v124
    %982 = vmatprep.subr.mxu0 %v128
    %983 = vmatpush1.msra.mxu0 %v127
    %984 = vmatprep.subr.mxu0 %v131
    %985 = vmatpush1.msra.mxu0 %v130
    %986 = vmatprep.subr.mxu0 %v134
    %987 = vmatpush1.msra.mxu0 %v133
    %988 = vmatprep.subr.mxu0 %v137
    %989 = vmatpush1.msra.mxu0 %v136
    %990 = vmatprep.subr.mxu0 %v140
    %991 = vmatpush1.msra.mxu0 %v139
    %992 = vmatprep.subr.mxu0 %v143
    %993 = vmatpush1.msra.mxu0 %v142
    %994 = vmatprep.subr.mxu0 %v146
    %995 = vmatpush1.msra.mxu0 %v145
    %996 = vmatprep.subr.mxu0 0.0
    %997 = vmatpush1.msra.mxu0 0.0
    %998 = vmatprep.subr.mxu0 0.0
    %999 = vmatpush1.msra.mxu0 0.0
    %1000 = vmatprep.subr.mxu0 0.0
    %1001 = vmatpush1.msra.mxu0 0.0
    %1002 = vmatprep.subr.mxu0 0.0
    %1003 = vmatpush1.msra.mxu0 0.0
    %1004 = vmatprep.subr.mxu0 0.0
    %1005 = vmatpush1.msra.mxu0 0.0
    %1006 = vmatprep.subr.mxu0 0.0
    %1007 = vmatpush1.msra.mxu0 0.0
    %1008 = vmatprep.subr.mxu0 0.0
    %1009 = vmatpush1.msra.mxu0 0.0
    %1010 = vmatprep.subr.mxu0 0.0
    %1011 = vmatpush1.msra.mxu0 0.0
    %1012 = vmatprep.subr.mxu0 0.0
    %1013 = vmatpush1.msra.mxu0 0.0
    %1014 = vmatprep.subr.mxu0 0.0
    %1015 = vmatpush1.msra.mxu0 0.0
    %1016 = vmatprep.subr.mxu0 0.0
    %1017 = vmatpush1.msra.mxu0 0.0
    %1018 = vmatprep.subr.mxu0 0.0
    %1019 = vmatpush1.msra.mxu0 0.0
    %1020 = vmatprep.subr.mxu0 0.0
    %1021 = vmatpush1.msra.mxu0 0.0
    %1022 = vmatprep.subr.mxu0 0.0
    %1023 = vmatpush1.msra.mxu0 0.0
    %1024 = vmatprep.subr.mxu0 0.0
    %1025 = vmatpush1.msra.mxu0 0.0
    %1026 = vmatprep.subr.mxu0 0.0
    %1027 = vmatpush1.msra.mxu0 0.0
    %1028 = vmatprep.mubr.f32.mxu0 0.0
    %1029 = vmatmul.mubr.f32.gmra.mrb[0].mxu0 %v953
    %v1030 = vpop.f32.mrb[0].mxu0
    %v1031 = vadd.f32 0.0, %v1030
    %v1032 = vpop.f32.mrb[0].mxu0
    %v1033 = vadd.f32 0.0, %v1032
    %1034 = vdwg.mxu0
    %1035 = vmatprep.subr.mxu0 0.0
    %1036 = vmatpush1.msra.mxu0 %v102
    %1037 = vmatprep.subr.mxu0 0.0
    %1038 = vmatpush1.msra.mxu0 %v105
    %1039 = vmatprep.subr.mxu0 0.0
    %1040 = vmatpush1.msra.mxu0 %v108
    %1041 = vmatprep.subr.mxu0 0.0
    %1042 = vmatpush1.msra.mxu0 %v111
    %1043 = vmatprep.subr.mxu0 0.0
    %1044 = vmatpush1.msra.mxu0 %v114
    %1045 = vmatprep.subr.mxu0 0.0
    %1046 = vmatpush1.msra.mxu0 %v117
    %1047 = vmatprep.subr.mxu0 0.0
    %1048 = vmatpush1.msra.mxu0 %v120
    %1049 = vmatprep.subr.mxu0 0.0
    %1050 = vmatpush1.msra.mxu0 %v123
    %1051 = vmatprep.subr.mxu0 0.0
    %1052 = vmatpush1.msra.mxu0 %v126
    %1053 = vmatprep.subr.mxu0 0.0
    %1054 = vmatpush1.msra.mxu0 %v129
    %1055 = vmatprep.subr.mxu0 0.0
    %1056 = vmatpush1.msra.mxu0 %v132
    %1057 = vmatprep.subr.mxu0 0.0
    %1058 = vmatpush1.msra.mxu0 %v135
    %1059 = vmatprep.subr.mxu0 0.0
    %1060 = vmatpush1.msra.mxu0 %v138
    %1061 = vmatprep.subr.mxu0 0.0
    %1062 = vmatpush1.msra.mxu0 %v141
    %1063 = vmatprep.subr.mxu0 0.0
    %1064 = vmatpush1.msra.mxu0 %v144
    %1065 = vmatprep.subr.mxu0 0.0
    %1066 = vmatpush1.msra.mxu0 %v147
    %1067 = vmatprep.subr.mxu0 0.0
    %1068 = vmatpush1.msra.mxu0 0.0
    %1069 = vmatprep.subr.mxu0 0.0
    %1070 = vmatpush1.msra.mxu0 0.0
    %1071 = vmatprep.subr.mxu0 0.0
    %1072 = vmatpush1.msra.mxu0 0.0
    %1073 = vmatprep.subr.mxu0 0.0
    %1074 = vmatpush1.msra.mxu0 0.0
    %1075 = vmatprep.subr.mxu0 0.0
    %1076 = vmatpush1.msra.mxu0 0.0
    %1077 = vmatprep.subr.mxu0 0.0
    %1078 = vmatpush1.msra.mxu0 0.0
    %1079 = vmatprep.subr.mxu0 0.0
    %1080 = vmatpush1.msra.mxu0 0.0
    %1081 = vmatprep.subr.mxu0 0.0
    %1082 = vmatpush1.msra.mxu0 0.0
    %1083 = vmatprep.subr.mxu0 0.0
    %1084 = vmatpush1.msra.mxu0 0.0
    %1085 = vmatprep.subr.mxu0 0.0
    %1086 = vmatpush1.msra.mxu0 0.0
    %1087 = vmatprep.subr.mxu0 0.0
    %1088 = vmatpush1.msra.mxu0 0.0
    %1089 = vmatprep.subr.mxu0 0.0
    %1090 = vmatpush1.msra.mxu0 0.0
    %1091 = vmatprep.subr.mxu0 0.0
    %1092 = vmatpush1.msra.mxu0 0.0
    %1093 = vmatprep.subr.mxu0 0.0
    %1094 = vmatpush1.msra.mxu0 0.0
    %1095 = vmatprep.subr.mxu0 0.0
    %1096 = vmatpush1.msra.mxu0 0.0
    %1097 = vmatprep.subr.mxu0 0.0
    %1098 = vmatpush1.msra.mxu0 0.0
    %1099 = vmatprep.mubr.f32.mxu0 0.0
    %1100 = vmatmul.mubr.f32.gmra.mrb[0].mxu0 %v953
    %v1101 = vpop.f32.mrb[0].mxu0
    %v1102 = vadd.f32 0.0, %v1101
    %v1103 = vpop.f32.mrb[0].mxu0
    %1104 = vdwg.mxu0
    %v1108 = vcombine.low %v1031, %v1033
    %v1110 = vunpack.c.l.s4 1966171168
    %v1111 = vunpack.c.0.s8 %v1110
    %v1112 = vlaneseq
    %v1113 = vshrl.u32 %v1112, 7
    %v1114 = vsub.s32 %v1111, %v1113
    %v1115 = vrot.slane %v1108, %v1114
    %v1117 = vunpack.c.l.s4 1966171168
    %v1118 = vunpack.c.0.s8 %v1117
    %v1119 = vlaneseq
    %v1120 = vshrl.u32 %v1119, 7
    %v1121 = vsub.s32 %v1118, %v1120
    %v1122 = vrot.slane %v1102, %v1121
    %v1123 = vcombine.low %v1115, %v1122
    %v1125 = vunpack.c.l.s4 1966171168
    %v1126 = vunpack.c.0.s8 %v1125
    %v1127 = vlaneseq
    %v1128 = vshrl.u32 %v1127, 7
    %v1129 = vsub.s32 %v1126, %v1128
    %v1130 = vrot.slane %v1123, %v1129
    %v1132 = vadd.f32 %v963, %v1130
    %v1133 = vadd.f32 %v1132, %v148
    %v1134 = vxor.u32 %v1133, 2147483648
    %v1135 = vmul.f32 %v1134, 1.442695
    %v1136 = vpow.pop %v1135
    %v1137 = vadd.f32 %v1136, 1.0
    %v1138 = vrcp.pop %v1137
    %v1139 = vmul.f32 1.0, %v1138
    %v1141 = vrot.slane %v1133, 1
    %v1143 = vtanh.pop %v1141
    %v1144 = vrot.slane %v1133, 2
    %v1146 = vxor.u32 %v1144, 2147483648
    %v1147 = vmul.f32 %v1146, 1.442695
    %v1148 = vpow.pop %v1147
    %v1149 = vadd.f32 %v1148, 1.0
    %v1150 = vrcp.pop %v1149
    %v1151 = vmul.f32 1.0, %v1150
    %v1152 = vmul.f32 %v1139, %v1143
    %v1153 = vtanh.pop %v1152
    %v1154 = vmul.f32 %v1151, %v1153
    %s1155 = sld [smem:[#allocation2 + $0x5]]
    %s1156 = sshra.s32 %s1155, 3
    %s1157 = sand.u32 %s1155, 7
    %s1158 = sshra.s32 %s1155, 3
    %s1159 = sand.u32 %s1155, 7
    %s1160 = smul.u32 %s1156, 3
    %s1161 = smul.u32 %s1160, 8
    %s1162 = sadd.s32 %s1161, %s1159
    %s1163 = scalar_lea.vmem [#allocation6], %s1162
    %v1164 = vld [vmem:[%s1163] ss:$8 sm:$0x7]
    %1165 = vmatprep.subr.mxu0 %v101
    %1166 = vmatpush1.msra.mxu0 %v100
    %1167 = vmatprep.subr.mxu0 %v104
    %1168 = vmatpush1.msra.mxu0 %v103
    %1169 = vmatprep.subr.mxu0 %v107
    %1170 = vmatpush1.msra.mxu0 %v106
    %1171 = vmatprep.subr.mxu0 %v110
    %1172 = vmatpush1.msra.mxu0 %v109
    %1173 = vmatprep.subr.mxu0 %v113
    %1174 = vmatpush1.msra.mxu0 %v112
    %1175 = vmatprep.subr.mxu0 %v116
    %1176 = vmatpush1.msra.mxu0 %v115
    %1177 = vmatprep.subr.mxu0 %v119
    %1178 = vmatpush1.msra.mxu0 %v118
    %1179 = vmatprep.subr.mxu0 %v122
    %1180 = vmatpush1.msra.mxu0 %v121
    %1181 = vmatprep.subr.mxu0 %v125
    %1182 = vmatpush1.msra.mxu0 %v124
    %1183 = vmatprep.subr.mxu0 %v128
    %1184 = vmatpush1.msra.mxu0 %v127
    %1185 = vmatprep.subr.mxu0 %v131
    %1186 = vmatpush1.msra.mxu0 %v130
    %1187 = vmatprep.subr.mxu0 %v134
    %1188 = vmatpush1.msra.mxu0 %v133
    %1189 = vmatprep.subr.mxu0 %v137
    %1190 = vmatpush1.msra.mxu0 %v136
    %1191 = vmatprep.subr.mxu0 %v140
    %1192 = vmatpush1.msra.mxu0 %v139
    %1193 = vmatprep.subr.mxu0 %v143
    %1194 = vmatpush1.msra.mxu0 %v142
    %1195 = vmatprep.subr.mxu0 %v146
    %1196 = vmatpush1.msra.mxu0 %v145
    %1197 = vmatprep.subr.mxu0 0.0
    %1198 = vmatpush1.msra.mxu0 0.0
    %1199 = vmatprep.subr.mxu0 0.0
    %1200 = vmatpush1.msra.mxu0 0.0
    %1201 = vmatprep.subr.mxu0 0.0
    %1202 = vmatpush1.msra.mxu0 0.0
    %1203 = vmatprep.subr.mxu0 0.0
    %1204 = vmatpush1.msra.mxu0 0.0
    %1205 = vmatprep.subr.mxu0 0.0
    %1206 = vmatpush1.msra.mxu0 0.0
    %1207 = vmatprep.subr.mxu0 0.0
    %1208 = vmatpush1.msra.mxu0 0.0
    %1209 = vmatprep.subr.mxu0 0.0
    %1210 = vmatpush1.msra.mxu0 0.0
    %1211 = vmatprep.subr.mxu0 0.0
    %1212 = vmatpush1.msra.mxu0 0.0
    %1213 = vmatprep.subr.mxu0 0.0
    %1214 = vmatpush1.msra.mxu0 0.0
    %1215 = vmatprep.subr.mxu0 0.0
    %1216 = vmatpush1.msra.mxu0 0.0
    %1217 = vmatprep.subr.mxu0 0.0
    %1218 = vmatpush1.msra.mxu0 0.0
    %1219 = vmatprep.subr.mxu0 0.0
    %1220 = vmatpush1.msra.mxu0 0.0
    %1221 = vmatprep.subr.mxu0 0.0
    %1222 = vmatpush1.msra.mxu0 0.0
    %1223 = vmatprep.subr.mxu0 0.0
    %1224 = vmatpush1.msra.mxu0 0.0
    %1225 = vmatprep.subr.mxu0 0.0
    %1226 = vmatpush1.msra.mxu0 0.0
    %1227 = vmatprep.subr.mxu0 0.0
    %1228 = vmatpush1.msra.mxu0 0.0
    %1229 = vmatprep.mubr.f32.mxu0 0.0
    %1230 = vmatmul.mubr.f32.gmra.mrb[0].mxu0 %v1154
    %v1231 = vpop.f32.mrb[0].mxu0
    %v1232 = vadd.f32 0.0, %v1231
    %v1233 = vpop.f32.mrb[0].mxu0
    %v1234 = vadd.f32 0.0, %v1233
    %1235 = vdwg.mxu0
    %1236 = vmatprep.subr.mxu0 0.0
    %1237 = vmatpush1.msra.mxu0 %v102
    %1238 = vmatprep.subr.mxu0 0.0
    %1239 = vmatpush1.msra.mxu0 %v105
    %1240 = vmatprep.subr.mxu0 0.0
    %1241 = vmatpush1.msra.mxu0 %v108
    %1242 = vmatprep.subr.mxu0 0.0
    %1243 = vmatpush1.msra.mxu0 %v111
    %1244 = vmatprep.subr.mxu0 0.0
    %1245 = vmatpush1.msra.mxu0 %v114
    %1246 = vmatprep.subr.mxu0 0.0
    %1247 = vmatpush1.msra.mxu0 %v117
    %1248 = vmatprep.subr.mxu0 0.0
    %1249 = vmatpush1.msra.mxu0 %v120
    %1250 = vmatprep.subr.mxu0 0.0
    %1251 = vmatpush1.msra.mxu0 %v123
    %1252 = vmatprep.subr.mxu0 0.0
    %1253 = vmatpush1.msra.mxu0 %v126
    %1254 = vmatprep.subr.mxu0 0.0
    %1255 = vmatpush1.msra.mxu0 %v129
    %1256 = vmatprep.subr.mxu0 0.0
    %1257 = vmatpush1.msra.mxu0 %v132
    %1258 = vmatprep.subr.mxu0 0.0
    %1259 = vmatpush1.msra.mxu0 %v135
    %1260 = vmatprep.subr.mxu0 0.0
    %1261 = vmatpush1.msra.mxu0 %v138
    %1262 = vmatprep.subr.mxu0 0.0
    %1263 = vmatpush1.msra.mxu0 %v141
    %1264 = vmatprep.subr.mxu0 0.0
    %1265 = vmatpush1.msra.mxu0 %v144
    %1266 = vmatprep.subr.mxu0 0.0
    %1267 = vmatpush1.msra.mxu0 %v147
    %1268 = vmatprep.subr.mxu0 0.0
    %1269 = vmatpush1.msra.mxu0 0.0
    %1270 = vmatprep.subr.mxu0 0.0
    %1271 = vmatpush1.msra.mxu0 0.0
    %1272 = vmatprep.subr.mxu0 0.0
    %1273 = vmatpush1.msra.mxu0 0.0
    %1274 = vmatprep.subr.mxu0 0.0
    %1275 = vmatpush1.msra.mxu0 0.0
    %1276 = vmatprep.subr.mxu0 0.0
    %1277 = vmatpush1.msra.mxu0 0.0
    %1278 = vmatprep.subr.mxu0 0.0
    %1279 = vmatpush1.msra.mxu0 0.0
    %1280 = vmatprep.subr.mxu0 0.0
    %1281 = vmatpush1.msra.mxu0 0.0
    %1282 = vmatprep.subr.mxu0 0.0
    %1283 = vmatpush1.msra.mxu0 0.0
    %1284 = vmatprep.subr.mxu0 0.0
    %1285 = vmatpush1.msra.mxu0 0.0
    %1286 = vmatprep.subr.mxu0 0.0
    %1287 = vmatpush1.msra.mxu0 0.0
    %1288 = vmatprep.subr.mxu0 0.0
    %1289 = vmatpush1.msra.mxu0 0.0
    %1290 = vmatprep.subr.mxu0 0.0
    %1291 = vmatpush1.msra.mxu0 0.0
    %1292 = vmatprep.subr.mxu0 0.0
    %1293 = vmatpush1.msra.mxu0 0.0
    %1294 = vmatprep.subr.mxu0 0.0
    %1295 = vmatpush1.msra.mxu0 0.0
    %1296 = vmatprep.subr.mxu0 0.0
    %1297 = vmatpush1.msra.mxu0 0.0
    %1298 = vmatprep.subr.mxu0 0.0
    %1299 = vmatpush1.msra.mxu0 0.0
    %1300 = vmatprep.mubr.f32.mxu0 0.0
    %1301 = vmatmul.mubr.f32.gmra.mrb[0].mxu0 %v1154
    %v1302 = vpop.f32.mrb[0].mxu0
    %v1303 = vadd.f32 0.0, %v1302
    %v1304 = vpop.f32.mrb[0].mxu0
    %1305 = vdwg.mxu0
    %v1309 = vcombine.low %v1232, %v1234
    %v1311 = vunpack.c.l.s4 1966171168
    %v1312 = vunpack.c.0.s8 %v1311
    %v1313 = vlaneseq
    %v1314 = vshrl.u32 %v1313, 7
    %v1315 = vsub.s32 %v1312, %v1314
    %v1316 = vrot.slane %v1309, %v1315
    %v1318 = vunpack.c.l.s4 1966171168
    %v1319 = vunpack.c.0.s8 %v1318
    %v1320 = vlaneseq
    %v1321 = vshrl.u32 %v1320, 7
    %v1322 = vsub.s32 %v1319, %v1321
    %v1323 = vrot.slane %v1303, %v1322
    %v1324 = vcombine.low %v1316, %v1323
    %v1326 = vunpack.c.l.s4 1966171168
    %v1327 = vunpack.c.0.s8 %v1326
    %v1328 = vlaneseq
    %v1329 = vshrl.u32 %v1328, 7
    %v1330 = vsub.s32 %v1327, %v1329
    %v1331 = vrot.slane %v1324, %v1330
    %v1333 = vadd.f32 %v1164, %v1331
    %v1334 = vadd.f32 %v1333, %v148
    %v1335 = vxor.u32 %v1334, 2147483648
    %v1336 = vmul.f32 %v1335, 1.442695
    %v1337 = vpow.pop %v1336
    %v1338 = vadd.f32 %v1337, 1.0
    %v1339 = vrcp.pop %v1338
    %v1340 = vmul.f32 1.0, %v1339
    %v1342 = vrot.slane %v1334, 1
    %v1344 = vtanh.pop %v1342
    %v1345 = vrot.slane %v1334, 2
    %v1347 = vxor.u32 %v1345, 2147483648
    %v1348 = vmul.f32 %v1347, 1.442695
    %v1349 = vpow.pop %v1348
    %v1350 = vadd.f32 %v1349, 1.0
    %v1351 = vrcp.pop %v1350
    %v1352 = vmul.f32 1.0, %v1351
    %v1353 = vmul.f32 %v1340, %v1344
    %v1354 = vtanh.pop %v1353
    %v1355 = vmul.f32 %v1352, %v1354
    %s1356 = scalar_lea.vmem [#allocation9], %s1155
    %v1357 = vld [vmem:[%s1356] sm:$0x1]
    %v1358 = vld [vmem:[#allocation10] sm:$0xff]
    %v1359 = vld [vmem:[#allocation10 + $0x8] sm:$0xff]
    %v1360 = vld [vmem:[#allocation10 + $0x10] sm:$0xff]
    %v1361 = vld [vmem:[#allocation10 + $0x18] sm:$0xff]
    %v1362 = vld [vmem:[#allocation10 + $0x20] sm:$0xff]
    %v1363 = vld [vmem:[#allocation10 + $0x28] sm:$0xff]
    %v1364 = vld [vmem:[#allocation10 + $0x30] sm:$0xff]
    %v1365 = vld [vmem:[#allocation10 + $0x38] sm:$0xff]
    %v1366 = vld [vmem:[#allocation10 + $0x40] sm:$0xff]
    %v1367 = vld [vmem:[#allocation10 + $0x48] sm:$0xff]
    %v1368 = vld [vmem:[#allocation10 + $0x50] sm:$0xff]
    %v1369 = vld [vmem:[#allocation10 + $0x58] sm:$0xff]
    %v1370 = vld [vmem:[#allocation10 + $0x60] sm:$0xff]
    %v1371 = vld [vmem:[#allocation10 + $0x68] sm:$0xff]
    %v1372 = vld [vmem:[#allocation10 + $0x70] sm:$0xff]
    %v1373 = vld [vmem:[#allocation10 + $0x78] sm:$0xff]
    %1374 = vmatprep.subr.mxu0 0.0
    %1375 = vmatpush1.msra.mxu0 %v1358
    %1376 = vmatprep.subr.mxu0 0.0
    %1377 = vmatpush1.msra.mxu0 %v1359
    %1378 = vmatprep.subr.mxu0 0.0
    %1379 = vmatpush1.msra.mxu0 %v1360
    %1380 = vmatprep.subr.mxu0 0.0
    %1381 = vmatpush1.msra.mxu0 %v1361
    %1382 = vmatprep.subr.mxu0 0.0
    %1383 = vmatpush1.msra.mxu0 %v1362
    %1384 = vmatprep.subr.mxu0 0.0
    %1385 = vmatpush1.msra.mxu0 %v1363
    %1386 = vmatprep.subr.mxu0 0.0
    %1387 = vmatpush1.msra.mxu0 %v1364
    %1388 = vmatprep.subr.mxu0 0.0
    %1389 = vmatpush1.msra.mxu0 %v1365
    %1390 = vmatprep.subr.mxu0 0.0
    %1391 = vmatpush1.msra.mxu0 %v1366
    %1392 = vmatprep.subr.mxu0 0.0
    %1393 = vmatpush1.msra.mxu0 %v1367
    %1394 = vmatprep.subr.mxu0 0.0
    %1395 = vmatpush1.msra.mxu0 %v1368
    %1396 = vmatprep.subr.mxu0 0.0
    %1397 = vmatpush1.msra.mxu0 %v1369
    %1398 = vmatprep.subr.mxu0 0.0
    %1399 = vmatpush1.msra.mxu0 %v1370
    %1400 = vmatprep.subr.mxu0 0.0
    %1401 = vmatpush1.msra.mxu0 %v1371
    %1402 = vmatprep.subr.mxu0 0.0
    %1403 = vmatpush1.msra.mxu0 %v1372
    %1404 = vmatprep.subr.mxu0 0.0
    %1405 = vmatpush1.msra.mxu0 %v1373
    %1406 = vmatprep.subr.mxu0 0.0
    %1407 = vmatpush1.msra.mxu0 0.0
    %1408 = vmatprep.subr.mxu0 0.0
    %1409 = vmatpush1.msra.mxu0 0.0
    %1410 = vmatprep.subr.mxu0 0.0
    %1411 = vmatpush1.msra.mxu0 0.0
    %1412 = vmatprep.subr.mxu0 0.0
    %1413 = vmatpush1.msra.mxu0 0.0
    %1414 = vmatprep.subr.mxu0 0.0
    %1415 = vmatpush1.msra.mxu0 0.0
    %1416 = vmatprep.subr.mxu0 0.0
    %1417 = vmatpush1.msra.mxu0 0.0
    %1418 = vmatprep.subr.mxu0 0.0
    %1419 = vmatpush1.msra.mxu0 0.0
    %1420 = vmatprep.subr.mxu0 0.0
    %1421 = vmatpush1.msra.mxu0 0.0
    %1422 = vmatprep.subr.mxu0 0.0
    %1423 = vmatpush1.msra.mxu0 0.0
    %1424 = vmatprep.subr.mxu0 0.0
    %1425 = vmatpush1.msra.mxu0 0.0
    %1426 = vmatprep.subr.mxu0 0.0
    %1427 = vmatpush1.msra.mxu0 0.0
    %1428 = vmatprep.subr.mxu0 0.0
    %1429 = vmatpush1.msra.mxu0 0.0
    %1430 = vmatprep.subr.mxu0 0.0
    %1431 = vmatpush1.msra.mxu0 0.0
    %1432 = vmatprep.subr.mxu0 0.0
    %1433 = vmatpush1.msra.mxu0 0.0
    %1434 = vmatprep.subr.mxu0 0.0
    %1435 = vmatpush1.msra.mxu0 0.0
    %1436 = vmatprep.subr.mxu0 0.0
    %1437 = vmatpush1.msra.mxu0 0.0
    %1438 = vmatprep.mubr.f32.mxu0 0.0
    %1439 = vmatmul.mubr.f32.gmra.mrb[0].mxu0 %v1154
    %v1440 = vpop.f32.mrb[0].mxu0
    %v1441 = vadd.f32 0.0, %v1440
    %v1442 = vpop.f32.mrb[0].mxu0
    %1443 = vdwg.mxu0
    %v1444 = vadd.f32 %v1357, %v1441
    %v1445 = vld [vmem:[%s7] sm:$0x1]
    %v1446 = vadd.f32 %v1444, %v1445
    %vm1447 = vcmask 1040384
    %v1448 = vsel %vm1447, %v1446, -inf
    %1449 = vmax.xlane.f32.xlu0 %v1448
    %v1450 = vpop.xlane.xlu0 %1449
    %v1451 = vsub.f32 %v1446, %v1450
    %v1452 = vmul.f32 %v1451, 1.442695
    %v1453 = vpow.pop %v1452
    %v1454 = vsel %vm1447, %v1453, 0.0
    %1455 = vadd.xlane.f32.xlu0 %v1454
    %v1456 = vpop.xlane.xlu0 %1455
    %v1457 = vlog2.pop %v1456
    %v1458 = vmul.f32 %v1457, 0.6931472
    %v1459 = vsub.f32 %v1451, %v1458
    %1460 = vst [vmem:[#allocation12] sm:$0x1] %v1459
    %1461 = vst [vmem:[#allocation13] sm:$0x1] %v1355
    %1462 = vst [vmem:[#allocation15] sm:$0x1] %v1353
    // Predicated region
    $region54: #{_run_fused.1} parent=1 // pred_check
      _
    $region55: #{_run_fused.1} parent=1 // pred_check_branch
      %1464 = sbr.rel (0) target = $region57
    $region56: #{_run_fused.1} parent=1 // pred_region
      %s1466 = ssub.s32 16, 16
      %1467 = vsyncadd [#allocation4], %s1466
      %s1469 = sshll.u32 [#allocation12], 4
      %s1470 = int_to_ptr.vmem [resolvable:$true] %s1469
      %1472 = dma.vmem_to_hbm [thread:$0]  %s1470, 16, %s8, [#allocation4]
    $region57: #{_run_fused.1} parent=1 // pred_fallthru
      _
    // Predicated region
    $region58: #{_run_fused.1} parent=1 // pred_check
      _
    $region59: #{_run_fused.1} parent=1 // pred_check_branch
      %1474 = sbr.rel (0) target = $region61
    $region60: #{_run_fused.1} parent=1 // pred_region
      %s1476 = ssub.s32 16, 16
      %1477 = vsyncadd [#allocation14], %s1476
      %s1479 = sshll.u32 [#allocation13], 4
      %s1480 = int_to_ptr.vmem [resolvable:$true] %s1479
      %1482 = dma.vmem_to_hbm [thread:$0]  %s1480, 16, %s9, [#allocation14]
    $region61: #{_run_fused.1} parent=1 // pred_fallthru
      _
    // Predicated region
    $region62: #{_run_fused.1} parent=1 // pred_check
      _
    $region63: #{_run_fused.1} parent=1 // pred_check_branch
      %1484 = sbr.rel (0) target = $region65
    $region64: #{_run_fused.1} parent=1 // pred_region
      %s1486 = ssub.s32 16, 16
      %1487 = vsyncadd [#allocation14], %s1486
      %s1489 = sshll.u32 [#allocation15], 4
      %s1490 = int_to_ptr.vmem [resolvable:$true] %s1489
      %1492 = dma.vmem_to_hbm [thread:$0]  %s1490, 16, %s10, [#allocation14]
    $region65: #{_run_fused.1} parent=1 // pred_fallthru
      _
    // Predicated region
    $region66: #{_run_fused.1} parent=1 // pred_check
      _
    $region67: #{_run_fused.1} parent=1 // pred_check_branch
      %1494 = sbr.rel (0) target = $region69
    $region68: #{_run_fused.1} parent=1 // pred_region
      %1495 = dma.done [#allocation4], 16
    $region69: #{_run_fused.1} parent=1 // pred_fallthru
      _
    // Predicated region
    $region70: #{_run_fused.1} parent=1 // pred_check
      _
    $region71: #{_run_fused.1} parent=1 // pred_check_branch
      %1497 = sbr.rel (0) target = $region73
    $region72: #{_run_fused.1} parent=1 // pred_region
      %1498 = dma.done [#allocation14], 16
    $region73: #{_run_fused.1} parent=1 // pred_fallthru
      _
    // Predicated region
    $region74: #{_run_fused.1} parent=1 // pred_check
      _
    $region75: #{_run_fused.1} parent=1 // pred_check_branch
      %1500 = sbr.rel (0) target = $region77
    $region76: #{_run_fused.1} parent=1 // pred_region
      %1501 = dma.done [#allocation14], 16
    $region77: #{_run_fused.1} parent=1 // pred_fallthru
      _
    %1502 = vsyncpa [#allocation3], 1
    %1503 = vsyncpa [#allocation8], 1
    %1504 = vsyncpa [#allocation11], 1
    %1505 = vsyncpa [#allocation4], 1
    %1506 = vsyncpa [#allocation14], 1
    %1507 = vsyncpa [#allocation5], 1

</llo_original>
